<compile_context>
chip_gen: v5e
topology: v5e:2x2
jax: 0.10.0
libtpu: 0.0.40
codegen_flags: <defaults>
</compile_context>

<pallas_src>
import functools

import jax
import jax.numpy as jnp
from jax.experimental import pallas as pl
from jax.experimental.pallas import tpu as pltpu

_OFF = 128          # lane offset of the hidden interior inside hpad (aligned)
_TAIL = 128         # zero tail after the interior (covers bottom-pad reads)


def _fused_conv_kernel(xcol_ref, w1_ref, b1_ref, w2_ref, b2_ref, mask_ref,
                       o_ref, hpad_ref, stk_ref, *, H, W):
    """conv1 -> bias -> ReLU -> conv2 -> bias for one image.

    Layout: channels on sublanes, flattened "wide" spatial (row width Wp=W+2)
    on lanes.  The two wrap-around columns per wide row are masked to zero so
    they act as the left/right zero padding for conv2; they are dropped by the
    wrapper for the final output.

    xcol_ref: (1, 9*Cin, Lw) bf16  pre-built conv1 im2col (tap-major rows)
    w1_ref  : (Chid, 9*Cin) bf16   conv1 weights matching xcol row order
    b1_ref  : (Chid, 1)     f32
    w2_ref  : (Cout, 9*Chid) bf16  conv2 weights matching stacked-hidden rows
    b2_ref  : (Cout, 1)     f32
    mask_ref: (1, Lw)       f32    1.0 on real columns, 0.0 on wrap columns
    o_ref   : (1, Cout, Lw) f32    conv2 output in wide layout
    hpad_ref: (Chid, _OFF + Lw + _TAIL) bf16  zero-haloed hidden (VMEM scratch)
    stk_ref : (9*Chid, Lw) bf16    conv2 im2col stack (VMEM scratch)
    """
    Wp = W + 2
    Lw = H * Wp
    Chid = hpad_ref.shape[0]
    Lh = hpad_ref.shape[1]

    # Zero only the two halo ranges (interior is fully rewritten every step).
    hpad_ref[:, :_OFF] = jnp.zeros((Chid, _OFF), hpad_ref.dtype)
    hpad_ref[:, _OFF + Lw:] = jnp.zeros((Chid, Lh - _OFF - Lw), hpad_ref.dtype)

    # ---- conv1: one K = 9*Cin matmul on the pre-built im2col input.
    h = jnp.dot(w1_ref[...], xcol_ref[0],
                preferred_element_type=jnp.float32)            # (Chid, Lw) f32
    # bias + ReLU + zero the wrap columns (f32), store interior as bf16.
    h = jnp.maximum(h + b1_ref[...], 0.0) * mask_ref[...]
    hpad_ref[:, _OFF:_OFF + Lw] = h.astype(hpad_ref.dtype)

    # ---- build the conv2 im2col stack: 9 sublane-aligned copies from hpad.
    base = _OFF - (Wp + 1)          # lane index of padded-coordinate origin
    for t in range(9):
        dy, dx = divmod(t, 3)
        off = base + dy * Wp + dx
        stk_ref[t * Chid:(t + 1) * Chid, :] = hpad_ref[:, off:off + Lw]

    # ---- conv2: one K = 9*Chid matmul.
    y = jnp.dot(w2_ref[...], stk_ref[...],
                preferred_element_type=jnp.float32)            # (Cout, Lw) f32
    o_ref[0] = (y + b2_ref[...]).astype(o_ref.dtype)


def fused_conv_relu_conv(x_nchw, w1, b1, w2, b2):
    """YourModelClass.forward: conv1 -> ReLU -> conv2, NCHW in / NCHW out.

    x_nchw: (N, Cin, H, W) f32
    w1: (Chid, Cin, 3, 3) OIHW,  b1: (Chid,)
    w2: (Cout, Chid, 3, 3) OIHW, b2: (Cout,)
    """
    N, Cin, H, W = x_nchw.shape
    Chid = w1.shape[0]
    Cout = w2.shape[0]
    Wp = W + 2                   # "wide" row width (1 zero col each side)
    Lx = (H + 3) * Wp            # padded rows: 1 top + 2 bottom
    Lw = H * Wp                  # wide output length per image
    Lh = _OFF + Lw + _TAIL       # haloed hidden length (interior lane-aligned)

    # Spatial pad + flatten; build the tiny conv1 im2col with XLA (KBs/image).
    xp = jnp.pad(x_nchw, ((0, 0), (0, 0), (1, 2), (1, 1))).reshape(N, Cin, Lx)
    offs = [dy * Wp + dx for dy in range(3) for dx in range(3)]
    xcol = jnp.concatenate([xp[:, :, o:o + Lw] for o in offs], axis=1)
    xcol = xcol.astype(jnp.bfloat16)                          # (N, 9*Cin, Lw)

    # Weights OIHW -> (Cout, 9*Cin) matching tap-major im2col row order;
    # cast matmul operands to bf16, keep biases (elementwise path) in f32.
    w1m = jnp.transpose(w1, (0, 2, 3, 1)).reshape(Chid, 9 * Cin)
    w1m = w1m.astype(jnp.bfloat16)
    w2m = jnp.transpose(w2, (0, 2, 3, 1)).reshape(Cout, 9 * Chid)
    w2m = w2m.astype(jnp.bfloat16)
    b1c = b1.reshape(Chid, 1).astype(jnp.float32)
    b2c = b2.reshape(Cout, 1).astype(jnp.float32)

    # Mask zeroing the 2 wrap-around columns of each wide row.
    col = jnp.arange(Lw, dtype=jnp.int32) % Wp
    mask = (col < W).astype(jnp.float32).reshape(1, Lw)

    kernel = functools.partial(_fused_conv_kernel, H=H, W=W)
    out_wide = pl.pallas_call(
        kernel,
        out_shape=jax.ShapeDtypeStruct((N, Cout, Lw), jnp.float32),
        grid_spec=pltpu.PrefetchScalarGridSpec(
            num_scalar_prefetch=0,
            grid=(N,),                                   # one image per step
            in_specs=[
                pl.BlockSpec((1, 9 * Cin, Lw), lambda n: (n, 0, 0)),
                pl.BlockSpec((Chid, 9 * Cin), lambda n: (0, 0)),
                pl.BlockSpec((Chid, 1), lambda n: (0, 0)),
                pl.BlockSpec((Cout, 9 * Chid), lambda n: (0, 0)),
                pl.BlockSpec((Cout, 1), lambda n: (0, 0)),
                pl.BlockSpec((1, Lw), lambda n: (0, 0)),
            ],
            out_specs=pl.BlockSpec((1, Cout, Lw), lambda n: (n, 0, 0)),
            scratch_shapes=[
                pltpu.VMEM((Chid, Lh), jnp.bfloat16),        # haloed hidden
                pltpu.VMEM((9 * Chid, Lw), jnp.bfloat16),    # conv2 im2col
            ],
        ),
        compiler_params=pltpu.CompilerParams(
            dimension_semantics=("parallel",)),          # v7x: images over TCs
    )(xcol, w1m, b1c, w2m, b2c, mask)

    # Drop the 2 wrap-around columns: (N, Cout, H, Wp) -> (N, Cout, H, W).
    return out_wide.reshape(N, Cout, H, Wp)[:, :, :, :W]


forward = jax.jit(fused_conv_relu_conv)


def init_params(key, input_channels, output_channels, hidden=64):
    """PyTorch-like uniform(-1/sqrt(fan_in), ...) init; weights stored OIHW."""
    k1, k2, k3, k4 = jax.random.split(key, 4)
    bound1 = 1.0 / jnp.sqrt(input_channels * 9.0)
    w1 = jax.random.uniform(k1, (hidden, input_channels, 3, 3),
                            jnp.float32, -bound1, bound1)
    b1 = jax.random.uniform(k2, (hidden,), jnp.float32, -bound1, bound1)
    bound2 = 1.0 / jnp.sqrt(hidden * 9.0)
    w2 = jax.random.uniform(k3, (output_channels, hidden, 3, 3),
                            jnp.float32, -bound2, bound2)
    b2 = jax.random.uniform(k4, (output_channels,), jnp.float32,
                            -bound2, bound2)
    return w1, b1, w2, b2


def _reference(x, w1, b1, w2, b2):
    dn = ("NCHW", "OIHW", "NCHW")
    h = jax.lax.conv_general_dilated(x, w1, (1, 1), "SAME",
                                     dimension_numbers=dn)
    h = jnp.maximum(h + b1.reshape(1, -1, 1, 1), 0.0)
    y = jax.lax.conv_general_dilated(h, w2, (1, 1), "SAME",
                                     dimension_numbers=dn)
    return y + b2.reshape(1, -1, 1, 1)


if __name__ == "__main__":
    key = jax.random.PRNGKey(0)
    k_x, k_p = jax.random.split(key)

    batch, input_channels, output_channels, H, W = 2, 4, 3, 16, 16
    x = jax.random.normal(k_x, (batch, input_channels, H, W), jnp.float32)
    w1, b1, w2, b2 = init_params(k_p, input_channels, output_channels)

    out = forward(x, w1, b1, w2, b2)
    jax.block_until_ready(out)
    assert out.shape == (batch, output_channels, H, W), out.shape

    ref = _reference(x, w1, b1, w2, b2)
    max_err = float(jnp.max(jnp.abs(out - ref)))
    assert bool(jnp.allclose(out, ref, rtol=1e-2, atol=1e-2)), max_err
    print("KERNEL_OK")
</pallas_src>

<mosaic_0001>
module attributes {stable_mosaic.version = 11 : i64} {
  func.func @_fused_conv_kernel(%arg0: i32, %arg1: memref<1x36x288xbf16, #tpu.memory_space<vmem>>, %arg2: memref<64x36xbf16, #tpu.memory_space<vmem>>, %arg3: memref<64x1xf32, #tpu.memory_space<vmem>>, %arg4: memref<3x576xbf16, #tpu.memory_space<vmem>>, %arg5: memref<3x1xf32, #tpu.memory_space<vmem>>, %arg6: memref<1x288xf32, #tpu.memory_space<vmem>>, %arg7: memref<1x3x288xf32, #tpu.memory_space<vmem>>, %arg8: memref<64x544xbf16, #tpu.memory_space<vmem>>, %arg9: memref<576x288xbf16, #tpu.memory_space<vmem>>) attributes {dimension_semantics = [#tpu.dimension_semantics<parallel>], iteration_bounds = array<i64: 2>, scalar_prefetch = 0 : i64, scratch_operands = 2 : i64, tpu.core_type = #tpu.core_type<tc>, window_params = [{transform_indices = @transform_0, window_bounds = array<i64: 1, 36, 288>}, {pipeline_mode = #tpu.pipeline_mode<synchronous>, transform_indices = @transform_1, window_bounds = array<i64: 64, 36>}, {pipeline_mode = #tpu.pipeline_mode<synchronous>, transform_indices = @transform_2, window_bounds = array<i64: 64, 1>}, {pipeline_mode = #tpu.pipeline_mode<synchronous>, transform_indices = @transform_3, window_bounds = array<i64: 3, 576>}, {pipeline_mode = #tpu.pipeline_mode<synchronous>, transform_indices = @transform_4, window_bounds = array<i64: 3, 1>}, {pipeline_mode = #tpu.pipeline_mode<synchronous>, transform_indices = @transform_5, window_bounds = array<i64: 1, 288>}, {transform_indices = @transform_6, window_bounds = array<i64: 1, 3, 288>}]} {
    %cst = arith.constant 0.000000e+00 : bf16
    %0 = vector.broadcast %cst : bf16 to vector<64x128xbf16>
    %c0 = arith.constant 0 : index
    %c0_0 = arith.constant 0 : index
    %1 = vector.load %arg8[%c0, %c0_0] : memref<64x544xbf16, #tpu.memory_space<vmem>>, vector<64x128xbf16>
    tpu.vector_store %arg8[%c0, %c0_0], %0 {strides = array<i32>} : memref<64x544xbf16, #tpu.memory_space<vmem>>, vector<64x128xbf16>,
    %cst_1 = arith.constant 0.000000e+00 : bf16
    %2 = vector.broadcast %cst_1 : bf16 to vector<64x128xbf16>
    %c0_2 = arith.constant 0 : index
    %c416 = arith.constant 416 : index
    %3 = vector.load %arg8[%c0_2, %c416] : memref<64x544xbf16, #tpu.memory_space<vmem>>, vector<64x128xbf16>
    tpu.vector_store %arg8[%c0_2, %c416], %2 {strides = array<i32>} : memref<64x544xbf16, #tpu.memory_space<vmem>>, vector<64x128xbf16>,
    %c0_3 = arith.constant 0 : index
    %c0_4 = arith.constant 0 : index
    %4 = vector.load %arg2[%c0_3, %c0_4] : memref<64x36xbf16, #tpu.memory_space<vmem>>, vector<64x36xbf16>
    %c0_5 = arith.constant 0 : index
    %c0_6 = arith.constant 0 : index
    %c0_7 = arith.constant 0 : index
    %5 = vector.load %arg1[%c0_5, %c0_6, %c0_7] : memref<1x36x288xbf16, #tpu.memory_space<vmem>>, vector<1x36x288xbf16>
    %6 = vector.shape_cast %5 : vector<1x36x288xbf16> to vector<36x288xbf16>
    %cst_8 = arith.constant dense<0.000000e+00> : vector<64x288xf32>
    %7 = tpu.matmul %4, %6, %cst_8 {dimension_numbers = #tpu.dot_dimension_numbers<[1], [0], [0], [1], [0, 0, 1, 1], [], []>} : vector<64x36xbf16>, vector<36x288xbf16>, vector<64x288xf32> -> vector<64x288xf32>
    %c0_9 = arith.constant 0 : index
    %c0_10 = arith.constant 0 : index
    %8 = vector.load %arg3[%c0_9, %c0_10] : memref<64x1xf32, #tpu.memory_space<vmem>>, vector<64x1xf32>
    %9 = vector.broadcast %8 : vector<64x1xf32> to vector<64x288xf32>
    %10 = arith.addf %7, %9 : vector<64x288xf32>
    %cst_11 = arith.constant 0.000000e+00 : f32
    %11 = vector.broadcast %cst_11 : f32 to vector<64x288xf32>
    %12 = arith.maximumf %10, %11 : vector<64x288xf32>
    %c0_12 = arith.constant 0 : index
    %c0_13 = arith.constant 0 : index
    %13 = vector.load %arg6[%c0_12, %c0_13] : memref<1x288xf32, #tpu.memory_space<vmem>>, vector<1x288xf32>
    %14 = vector.broadcast %13 : vector<1x288xf32> to vector<64x288xf32>
    %15 = arith.mulf %12, %14 : vector<64x288xf32>
    %16 = arith.truncf %15 : vector<64x288xf32> to vector<64x288xbf16>
    %c0_14 = arith.constant 0 : index
    %c128 = arith.constant 128 : index
    %17 = vector.load %arg8[%c0_14, %c128] : memref<64x544xbf16, #tpu.memory_space<vmem>>, vector<64x288xbf16>
    tpu.vector_store %arg8[%c0_14, %c128], %16 {strides = array<i32>} : memref<64x544xbf16, #tpu.memory_space<vmem>>, vector<64x288xbf16>,
    %c0_15 = arith.constant 0 : index
    %c109 = arith.constant 109 : index
    %18 = vector.load %arg8[%c0_15, %c109] : memref<64x544xbf16, #tpu.memory_space<vmem>>, vector<64x288xbf16>
    %c0_16 = arith.constant 0 : index
    %c0_17 = arith.constant 0 : index
    %19 = vector.load %arg9[%c0_16, %c0_17] : memref<576x288xbf16, #tpu.memory_space<vmem>>, vector<64x288xbf16>
    tpu.vector_store %arg9[%c0_16, %c0_17], %18 {strides = array<i32>} : memref<576x288xbf16, #tpu.memory_space<vmem>>, vector<64x288xbf16>,
    %c0_18 = arith.constant 0 : index
    %c110 = arith.constant 110 : index
    %20 = vector.load %arg8[%c0_18, %c110] : memref<64x544xbf16, #tpu.memory_space<vmem>>, vector<64x288xbf16>
    %c64 = arith.constant 64 : index
    %c0_19 = arith.constant 0 : index
    %21 = vector.load %arg9[%c64, %c0_19] : memref<576x288xbf16, #tpu.memory_space<vmem>>, vector<64x288xbf16>
    tpu.vector_store %arg9[%c64, %c0_19], %20 {strides = array<i32>} : memref<576x288xbf16, #tpu.memory_space<vmem>>, vector<64x288xbf16>,
    %c0_20 = arith.constant 0 : index
    %c111 = arith.constant 111 : index
    %22 = vector.load %arg8[%c0_20, %c111] : memref<64x544xbf16, #tpu.memory_space<vmem>>, vector<64x288xbf16>
    %c128_21 = arith.constant 128 : index
    %c0_22 = arith.constant 0 : index
    %23 = vector.load %arg9[%c128_21, %c0_22] : memref<576x288xbf16, #tpu.memory_space<vmem>>, vector<64x288xbf16>
    tpu.vector_store %arg9[%c128_21, %c0_22], %22 {strides = array<i32>} : memref<576x288xbf16, #tpu.memory_space<vmem>>, vector<64x288xbf16>,
    %c0_23 = arith.constant 0 : index
    %c127 = arith.constant 127 : index
    %24 = vector.load %arg8[%c0_23, %c127] : memref<64x544xbf16, #tpu.memory_space<vmem>>, vector<64x288xbf16>
    %c192 = arith.constant 192 : index
    %c0_24 = arith.constant 0 : index
    %25 = vector.load %arg9[%c192, %c0_24] : memref<576x288xbf16, #tpu.memory_space<vmem>>, vector<64x288xbf16>
    tpu.vector_store %arg9[%c192, %c0_24], %24 {strides = array<i32>} : memref<576x288xbf16, #tpu.memory_space<vmem>>, vector<64x288xbf16>,
    %c0_25 = arith.constant 0 : index
    %c128_26 = arith.constant 128 : index
    %26 = vector.load %arg8[%c0_25, %c128_26] : memref<64x544xbf16, #tpu.memory_space<vmem>>, vector<64x288xbf16>
    %c256 = arith.constant 256 : index
    %c0_27 = arith.constant 0 : index
    %27 = vector.load %arg9[%c256, %c0_27] : memref<576x288xbf16, #tpu.memory_space<vmem>>, vector<64x288xbf16>
    tpu.vector_store %arg9[%c256, %c0_27], %26 {strides = array<i32>} : memref<576x288xbf16, #tpu.memory_space<vmem>>, vector<64x288xbf16>,
    %c0_28 = arith.constant 0 : index
    %c129 = arith.constant 129 : index
    %28 = vector.load %arg8[%c0_28, %c129] : memref<64x544xbf16, #tpu.memory_space<vmem>>, vector<64x288xbf16>
    %c320 = arith.constant 320 : index
    %c0_29 = arith.constant 0 : index
    %29 = vector.load %arg9[%c320, %c0_29] : memref<576x288xbf16, #tpu.memory_space<vmem>>, vector<64x288xbf16>
    tpu.vector_store %arg9[%c320, %c0_29], %28 {strides = array<i32>} : memref<576x288xbf16, #tpu.memory_space<vmem>>, vector<64x288xbf16>,
    %c0_30 = arith.constant 0 : index
    %c145 = arith.constant 145 : index
    %30 = vector.load %arg8[%c0_30, %c145] : memref<64x544xbf16, #tpu.memory_space<vmem>>, vector<64x288xbf16>
    %c384 = arith.constant 384 : index
    %c0_31 = arith.constant 0 : index
    %31 = vector.load %arg9[%c384, %c0_31] : memref<576x288xbf16, #tpu.memory_space<vmem>>, vector<64x288xbf16>
    tpu.vector_store %arg9[%c384, %c0_31], %30 {strides = array<i32>} : memref<576x288xbf16, #tpu.memory_space<vmem>>, vector<64x288xbf16>,
    %c0_32 = arith.constant 0 : index
    %c146 = arith.constant 146 : index
    %32 = vector.load %arg8[%c0_32, %c146] : memref<64x544xbf16, #tpu.memory_space<vmem>>, vector<64x288xbf16>
    %c448 = arith.constant 448 : index
    %c0_33 = arith.constant 0 : index
    %33 = vector.load %arg9[%c448, %c0_33] : memref<576x288xbf16, #tpu.memory_space<vmem>>, vector<64x288xbf16>
    tpu.vector_store %arg9[%c448, %c0_33], %32 {strides = array<i32>} : memref<576x288xbf16, #tpu.memory_space<vmem>>, vector<64x288xbf16>,
    %c0_34 = arith.constant 0 : index
    %c147 = arith.constant 147 : index
    %34 = vector.load %arg8[%c0_34, %c147] : memref<64x544xbf16, #tpu.memory_space<vmem>>, vector<64x288xbf16>
    %c512 = arith.constant 512 : index
    %c0_35 = arith.constant 0 : index
    %35 = vector.load %arg9[%c512, %c0_35] : memref<576x288xbf16, #tpu.memory_space<vmem>>, vector<64x288xbf16>
    tpu.vector_store %arg9[%c512, %c0_35], %34 {strides = array<i32>} : memref<576x288xbf16, #tpu.memory_space<vmem>>, vector<64x288xbf16>,
    %c0_36 = arith.constant 0 : index
    %c0_37 = arith.constant 0 : index
    %36 = vector.load %arg4[%c0_36, %c0_37] : memref<3x576xbf16, #tpu.memory_space<vmem>>, vector<3x576xbf16>
    %c0_38 = arith.constant 0 : index
    %c0_39 = arith.constant 0 : index
    %37 = vector.load %arg9[%c0_38, %c0_39] : memref<576x288xbf16, #tpu.memory_space<vmem>>, vector<576x288xbf16>
    %cst_40 = arith.constant dense<0.000000e+00> : vector<3x288xf32>
    %38 = tpu.matmul %36, %37, %cst_40 {dimension_numbers = #tpu.dot_dimension_numbers<[1], [0], [0], [1], [0, 0, 1, 1], [], []>} : vector<3x576xbf16>, vector<576x288xbf16>, vector<3x288xf32> -> vector<3x288xf32>
    %c0_41 = arith.constant 0 : index
    %c0_42 = arith.constant 0 : index
    %39 = vector.load %arg5[%c0_41, %c0_42] : memref<3x1xf32, #tpu.memory_space<vmem>>, vector<3x1xf32>
    %40 = vector.broadcast %39 : vector<3x1xf32> to vector<3x288xf32>
    %41 = arith.addf %38, %40 : vector<3x288xf32>
    %c0_43 = arith.constant 0 : index
    %c0_44 = arith.constant 0 : index
    %c0_45 = arith.constant 0 : index
    %42 = vector.load %arg7[%c0_43, %c0_44, %c0_45] : memref<1x3x288xf32, #tpu.memory_space<vmem>>, vector<1x3x288xf32>
    %43 = vector.shape_cast %42 : vector<1x3x288xf32> to vector<3x288xf32>
    %44 = vector.shape_cast %41 : vector<3x288xf32> to vector<1x3x288xf32>
    tpu.vector_store %arg7[%c0_43, %c0_44, %c0_45], %44 {strides = array<i32>} : memref<1x3x288xf32, #tpu.memory_space<vmem>>, vector<1x3x288xf32>,
    return
  }
  func.func @transform_0(%arg0: i32) -> (i32, i32, i32) {
    %c0_i32 = arith.constant 0 : i32
    %c0_i32_0 = arith.constant 0 : i32
    %c0_i32_1 = arith.constant 0 : i32
    return %arg0, %c0_i32, %c0_i32_0 : i32, i32, i32
  }
  func.func @transform_1(%arg0: i32) -> (i32, i32) {
    %c0_i32 = arith.constant 0 : i32
    %c0_i32_0 = arith.constant 0 : i32
    %c0_i32_1 = arith.constant 0 : i32
    return %c0_i32, %c0_i32_0 : i32, i32
  }
  func.func @transform_2(%arg0: i32) -> (i32, i32) {
    %c0_i32 = arith.constant 0 : i32
    %c0_i32_0 = arith.constant 0 : i32
    %c0_i32_1 = arith.constant 0 : i32
    return %c0_i32, %c0_i32_0 : i32, i32
  }
  func.func @transform_3(%arg0: i32) -> (i32, i32) {
    %c0_i32 = arith.constant 0 : i32
    %c0_i32_0 = arith.constant 0 : i32
    %c0_i32_1 = arith.constant 0 : i32
    return %c0_i32, %c0_i32_0 : i32, i32
  }
  func.func @transform_4(%arg0: i32) -> (i32, i32) {
    %c0_i32 = arith.constant 0 : i32
    %c0_i32_0 = arith.constant 0 : i32
    %c0_i32_1 = arith.constant 0 : i32
    return %c0_i32, %c0_i32_0 : i32, i32
  }
  func.func @transform_5(%arg0: i32) -> (i32, i32) {
    %c0_i32 = arith.constant 0 : i32
    %c0_i32_0 = arith.constant 0 : i32
    %c0_i32_1 = arith.constant 0 : i32
    return %c0_i32, %c0_i32_0 : i32, i32
  }
  func.func @transform_6(%arg0: i32) -> (i32, i32, i32) {
    %c0_i32 = arith.constant 0 : i32
    %c0_i32_0 = arith.constant 0 : i32
    %c0_i32_1 = arith.constant 0 : i32
    return %arg0, %c0_i32, %c0_i32_0 : i32, i32, i32
  }
}

</mosaic_0001>

<llo_original>
// kernel: fused_conv_relu_conv.1
$region0: #{fused_conv_relu_conv.1}
  #allocation0 [shape = 'u32[]', space=smem, size = 0x4, offset = 0x4, fixed_abs, tag = 'smem constant byte address 0x4 - core index']
  #allocation1 [shape = 'u32[72,128]{1,0:T(1,128)}', space=vmem, size = 0x9000, scoped, tag = 'internal scratch']
  #allocation2 [shape = 'bf16[64,544]{1,0:T(8,128)(2,1)}', space=vmem, size = 0x14000, scoped, tag = 'scratch operand']
  #allocation3 [shape = 'bf16[576,288]{1,0:T(8,128)(2,1)}', space=vmem, size = 0x6c000, scoped, tag = 'scratch operand']
  %s0 = inlined_call_operand.vmem [shape: bf16[2,36,288], index: 0, kind: input, shape index: {}]
  %s1 = inlined_call_operand.vmem [shape: bf16[64,36], index: 1, kind: input, shape index: {}]
  %s2 = inlined_call_operand.vmem [shape: f32[64,1], index: 2, kind: input, shape index: {}]
  %s3 = inlined_call_operand.vmem [shape: bf16[3,576], index: 3, kind: input, shape index: {}]
  %s4 = inlined_call_operand.vmem [shape: f32[3,1], index: 4, kind: input, shape index: {}]
  %s5 = inlined_call_operand.vmem [shape: f32[1,288], index: 5, kind: input, shape index: {}]
  %s6 = inlined_call_operand.vmem [shape: f32[2,3,288], index: 6, kind: output, shape index: {}]
  %s7 = sld [smem:[#allocation0]]
  $region57: #{fused_conv_relu_conv.1} parent=0
    _
  %s9 = ssub.s32 1, %s7
  %s10 = scalar_select 0, %s9, %s7
  loop: start=0, step=1, limit=4
  $region2: #{fused_conv_relu_conv.1} parent=0 // loop_pre_header
    _
  $region3: #{fused_conv_relu_conv.1} parent=0 // loop_header
    %s12 = sphi 0, %s16
    %p13 = scmp.ge.s32.totalorder %s12, 4
    %s22 = sphi 0, %s24
    %s25 = sphi 0, %s22
    %s26 = sphi 0, %s25
    %s42 = sphi 0, %s26
    %s46 = sphi 0, %s46
    %s48 = sphi 0, %s46
    %s49 = sphi 0, %s48
    %s63 = sphi 0, %s49
    %s67 = sphi 0, %s67
    %s69 = sphi 0, %s67
    %s70 = sphi 0, %s69
    %s84 = sphi 0, %s70
    %s88 = sphi 0, %s88
    %s90 = sphi 0, %s88
    %s91 = sphi 0, %s90
    %s105 = sphi 0, %s91
    %s109 = sphi 0, %s109
    %s111 = sphi 0, %s109
    %s112 = sphi 0, %s111
    %s126 = sphi 0, %s112
    %s130 = sphi 0, %s130
    %s132 = sphi 0, %s130
    %s133 = sphi 0, %s132
    %s147 = sphi 0, %s133
    %s153 = sphi 0, %s155
    %s156 = sphi 0, %s153
    %s157 = sphi 0, %s156
    %s173 = sphi 0, %s157
  $region4: #{fused_conv_relu_conv.1} parent=0 // loop_header_branch
    %15 = sbr.rel (%p13) target = $region8
  $region5: #{fused_conv_relu_conv.1} parent=0 // loop_body
    %s17 = ssub.s32 %s12, 1
    %s18 = ssub.s32 %s12, 2
    %s19 = sadd.s32 %s12, 1
    %s20 = ssub.s32 %s12, %s19
    %p21 = scmp.eq.s32.totalorder %s20, 0
    %s23 = sadd.s32 %s22, 1
    %s24 = scalar_select %p21, %s22, %s23
    %p27 = pneg %p21
    %p28 = scmp.eq.s32.totalorder %s12, 1
    %p29 = por %p27, %p28
    %p30 = scmp.ne.s32.totalorder %s22, %s25
    %p31 = scmp.eq.s32.totalorder %s12, 0
    %p32 = por %p30, %p31
    %p33 = scmp.ne.s32.totalorder %s22, %s25
    %p34 = scmp.eq.s32.totalorder %s17, 1
    %p35 = por %p33, %p34
    %p36 = scmp.ne.s32.totalorder %s25, %s26
    %p37 = scmp.eq.s32.totalorder %s17, 0
    %p38 = por %p36, %p37
    %p39 = scmp.ne.s32.totalorder %s25, %s26
    %p40 = scmp.eq.s32.totalorder %s18, 1
    %p41 = por %p39, %p40
    %p43 = scmp.ne.s32.totalorder %s26, %s42
    %p44 = scmp.eq.s32.totalorder %s18, 0
    %p45 = por %p43, %p44
    %s47 = sadd.s32 %s46, 1
    %p50 = scmp.eq.s32.totalorder %s12, 1
    %p51 = scmp.ne.s32.totalorder %s46, %s48
    %p52 = scmp.eq.s32.totalorder %s12, 0
    %p53 = por %p51, %p52
    %p54 = scmp.ne.s32.totalorder %s46, %s48
    %p55 = scmp.eq.s32.totalorder %s17, 1
    %p56 = por %p54, %p55
    %p57 = scmp.ne.s32.totalorder %s48, %s49
    %p58 = scmp.eq.s32.totalorder %s17, 0
    %p59 = por %p57, %p58
    %p60 = scmp.ne.s32.totalorder %s48, %s49
    %p61 = scmp.eq.s32.totalorder %s18, 1
    %p62 = por %p60, %p61
    %p64 = scmp.ne.s32.totalorder %s49, %s63
    %p65 = scmp.eq.s32.totalorder %s18, 0
    %p66 = por %p64, %p65
    %s68 = sadd.s32 %s67, 1
    %p71 = scmp.eq.s32.totalorder %s12, 1
    %p72 = scmp.ne.s32.totalorder %s67, %s69
    %p73 = scmp.eq.s32.totalorder %s12, 0
    %p74 = por %p72, %p73
    %p75 = scmp.ne.s32.totalorder %s67, %s69
    %p76 = scmp.eq.s32.totalorder %s17, 1
    %p77 = por %p75, %p76
    %p78 = scmp.ne.s32.totalorder %s69, %s70
    %p79 = scmp.eq.s32.totalorder %s17, 0
    %p80 = por %p78, %p79
    %p81 = scmp.ne.s32.totalorder %s69, %s70
    %p82 = scmp.eq.s32.totalorder %s18, 1
    %p83 = por %p81, %p82
    %p85 = scmp.ne.s32.totalorder %s70, %s84
    %p86 = scmp.eq.s32.totalorder %s18, 0
    %p87 = por %p85, %p86
    %s89 = sadd.s32 %s88, 1
    %p92 = scmp.eq.s32.totalorder %s12, 1
    %p93 = scmp.ne.s32.totalorder %s88, %s90
    %p94 = scmp.eq.s32.totalorder %s12, 0
    %p95 = por %p93, %p94
    %p96 = scmp.ne.s32.totalorder %s88, %s90
    %p97 = scmp.eq.s32.totalorder %s17, 1
    %p98 = por %p96, %p97
    %p99 = scmp.ne.s32.totalorder %s90, %s91
    %p100 = scmp.eq.s32.totalorder %s17, 0
    %p101 = por %p99, %p100
    %p102 = scmp.ne.s32.totalorder %s90, %s91
    %p103 = scmp.eq.s32.totalorder %s18, 1
    %p104 = por %p102, %p103
    %p106 = scmp.ne.s32.totalorder %s91, %s105
    %p107 = scmp.eq.s32.totalorder %s18, 0
    %p108 = por %p106, %p107
    %s110 = sadd.s32 %s109, 1
    %p113 = scmp.eq.s32.totalorder %s12, 1
    %p114 = scmp.ne.s32.totalorder %s109, %s111
    %p115 = scmp.eq.s32.totalorder %s12, 0
    %p116 = por %p114, %p115
    %p117 = scmp.ne.s32.totalorder %s109, %s111
    %p118 = scmp.eq.s32.totalorder %s17, 1
    %p119 = por %p117, %p118
    %p120 = scmp.ne.s32.totalorder %s111, %s112
    %p121 = scmp.eq.s32.totalorder %s17, 0
    %p122 = por %p120, %p121
    %p123 = scmp.ne.s32.totalorder %s111, %s112
    %p124 = scmp.eq.s32.totalorder %s18, 1
    %p125 = por %p123, %p124
    %p127 = scmp.ne.s32.totalorder %s112, %s126
    %p128 = scmp.eq.s32.totalorder %s18, 0
    %p129 = por %p127, %p128
    %s131 = sadd.s32 %s130, 1
    %p134 = scmp.eq.s32.totalorder %s12, 1
    %p135 = scmp.ne.s32.totalorder %s130, %s132
    %p136 = scmp.eq.s32.totalorder %s12, 0
    %p137 = por %p135, %p136
    %p138 = scmp.ne.s32.totalorder %s130, %s132
    %p139 = scmp.eq.s32.totalorder %s17, 1
    %p140 = por %p138, %p139
    %p141 = scmp.ne.s32.totalorder %s132, %s133
    %p142 = scmp.eq.s32.totalorder %s17, 0
    %p143 = por %p141, %p142
    %p144 = scmp.ne.s32.totalorder %s132, %s133
    %p145 = scmp.eq.s32.totalorder %s18, 1
    %p146 = por %p144, %p145
    %p148 = scmp.ne.s32.totalorder %s133, %s147
    %p149 = scmp.eq.s32.totalorder %s18, 0
    %p150 = por %p148, %p149
    %s151 = ssub.s32 %s12, %s19
    %p152 = scmp.eq.s32.totalorder %s151, 0
    %s154 = sadd.s32 %s153, 1
    %s155 = scalar_select %p152, %s153, %s154
    %p158 = pneg %p152
    %p159 = scmp.eq.s32.totalorder %s12, 1
    %p160 = por %p158, %p159
    %p161 = scmp.ne.s32.totalorder %s153, %s156
    %p162 = scmp.eq.s32.totalorder %s12, 0
    %p163 = por %p161, %p162
    %p164 = scmp.ne.s32.totalorder %s153, %s156
    %p165 = scmp.eq.s32.totalorder %s17, 1
    %p166 = por %p164, %p165
    %p167 = scmp.ne.s32.totalorder %s156, %s157
    %p168 = scmp.eq.s32.totalorder %s17, 0
    %p169 = por %p167, %p168
    %p170 = scmp.ne.s32.totalorder %s156, %s157
    %p171 = scmp.eq.s32.totalorder %s18, 1
    %p172 = por %p170, %p171
    %p174 = scmp.ne.s32.totalorder %s157, %s173
    %p175 = scmp.eq.s32.totalorder %s18, 0
    %p176 = por %p174, %p175
    %p177 = scmp.le.s32.totalorder 1, %s12
    %p178 = scmp.lt.s32.totalorder %s12, 3
    %p179 = pnand %p177, %p178
    %p180 = pneg %p179
    // Predicated region
    $region9: #{fused_conv_relu_conv.1} parent=5 // pred_check
      _
    $region10: #{fused_conv_relu_conv.1} parent=5 // pred_check_branch
      %182 = sbr.rel (%p179) target = $region12
    $region11: #{fused_conv_relu_conv.1} parent=5 // pred_region
      %s183 = ssub.s32 %s12, 1
      // Predicated region
      $region13: #{fused_conv_relu_conv.1} parent=11 // pred_check
        %p184 = pneg %p59
      $region14: #{fused_conv_relu_conv.1} parent=11 // pred_check_branch
        %186 = sbr.rel (%p184) target = $region16
      $region15: #{fused_conv_relu_conv.1} parent=11 // pred_region
        _
      $region16: #{fused_conv_relu_conv.1} parent=11 // pred_fallthru
        _
      // Predicated region
      $region17: #{fused_conv_relu_conv.1} parent=11 // pred_check
        %p187 = pneg %p80
      $region18: #{fused_conv_relu_conv.1} parent=11 // pred_check_branch
        %189 = sbr.rel (%p187) target = $region20
      $region19: #{fused_conv_relu_conv.1} parent=11 // pred_region
        _
      $region20: #{fused_conv_relu_conv.1} parent=11 // pred_fallthru
        _
      // Predicated region
      $region21: #{fused_conv_relu_conv.1} parent=11 // pred_check
        %p190 = pneg %p101
      $region22: #{fused_conv_relu_conv.1} parent=11 // pred_check_branch
        %192 = sbr.rel (%p190) target = $region24
      $region23: #{fused_conv_relu_conv.1} parent=11 // pred_region
        _
      $region24: #{fused_conv_relu_conv.1} parent=11 // pred_fallthru
        _
      // Predicated region
      $region25: #{fused_conv_relu_conv.1} parent=11 // pred_check
        %p193 = pneg %p122
      $region26: #{fused_conv_relu_conv.1} parent=11 // pred_check_branch
        %195 = sbr.rel (%p193) target = $region28
      $region27: #{fused_conv_relu_conv.1} parent=11 // pred_region
        _
      $region28: #{fused_conv_relu_conv.1} parent=11 // pred_fallthru
        _
      // Predicated region
      $region29: #{fused_conv_relu_conv.1} parent=11 // pred_check
        %p196 = pneg %p143
      $region30: #{fused_conv_relu_conv.1} parent=11 // pred_check_branch
        %198 = sbr.rel (%p196) target = $region32
      $region31: #{fused_conv_relu_conv.1} parent=11 // pred_region
        _
      $region32: #{fused_conv_relu_conv.1} parent=11 // pred_fallthru
        _
    $region12: #{fused_conv_relu_conv.1} parent=5 // pred_fallthru
      _
    %p199 = scmp.lt.s32.totalorder %s12, 2
    // Predicated region
    $region33: #{fused_conv_relu_conv.1} parent=5 // pred_check
      %p200 = pneg %p199
    $region34: #{fused_conv_relu_conv.1} parent=5 // pred_check_branch
      %202 = sbr.rel (%p200) target = $region36
    $region35: #{fused_conv_relu_conv.1} parent=5 // pred_region
      // Predicated region
      $region37: #{fused_conv_relu_conv.1} parent=35 // pred_check
        %p203 = pneg %p32
      $region38: #{fused_conv_relu_conv.1} parent=35 // pred_check_branch
        %205 = sbr.rel (%p203) target = $region40
      $region39: #{fused_conv_relu_conv.1} parent=35 // pred_region
        %p206 = scmp.lt.s32.totalorder %s12, 1
        %s207 = scalar_select %p206, %s12, 1
        %s208 = smul.addr %s207, 15
        %s209 = smul.addr %s208, 4
        %s210 = scalar_lea.vmem %s0, %s209
      $region40: #{fused_conv_relu_conv.1} parent=35 // pred_fallthru
        _
    $region36: #{fused_conv_relu_conv.1} parent=5 // pred_fallthru
      _
    %p211 = scmp.le.s32.totalorder 1, %s12
    %p212 = scmp.lt.s32.totalorder %s12, 3
    %p213 = pnand %p211, %p212
    %p214 = pneg %p213
    // Predicated region
    $region41: #{fused_conv_relu_conv.1} parent=5 // pred_check
      _
    $region42: #{fused_conv_relu_conv.1} parent=5 // pred_check_branch
      %216 = sbr.rel (%p213) target = $region44
    $region43: #{fused_conv_relu_conv.1} parent=5 // pred_region
      %s217 = ssub.s32 %s12, 1
      %p218 = scmp.lt.s32.totalorder %s17, 1
      %s219 = scalar_select %p218, %s17, 1
      %s220 = smul.addr %s219, 15
      %s221 = smul.addr %s220, 4
      %s222 = scalar_lea.vmem %s0, %s221
      %p223 = pneg %p38
      %p224 = pneg %p35
      %p225 = pneg %p59
      %p226 = pneg %p56
      %p227 = pneg %p80
      %p228 = pneg %p77
      %p229 = pneg %p101
      %p230 = pneg %p98
      %p231 = pneg %p122
      %p232 = pneg %p119
      %p233 = pneg %p143
      %p234 = pneg %p140
      %p235 = pneg %p169
      %p236 = pneg %p166
      %p237 = scmp.lt.s32.totalorder %s17, 1
      %s238 = scalar_select %p237, %s17, 1
      %s239 = smul.addr %s238, 3
      %s240 = smul.addr %s239, 4
      %s241 = scalar_lea.vmem %s6, %s240
      %p242 = scmp.lt.s32.totalorder %s17, 1
      %s243 = scalar_select %p242, %s17, 1
      %s244 = smul.addr %s243, 15
      %s245 = smul.addr %s244, 4
      %s246 = scalar_lea.vmem %s0, %s245
      %p247 = scmp.lt.s32.totalorder %s17, 1
      %s248 = scalar_select %p247, %s17, 1
      %s249 = smul.addr %s248, 3
      %s250 = smul.addr %s249, 4
      %s251 = scalar_lea.vmem %s6, %s250
      %253 = vst [vmem:[#allocation2] sm:$0xf] 0
      %254 = vst [vmem:[#allocation2 + $0x14] sm:$0xf] 0
      %255 = vst [vmem:[#allocation2 + $0x28] sm:$0xf] 0
      %256 = vst [vmem:[#allocation2 + $0x3c] sm:$0xf] 0
      %257 = vst [vmem:[#allocation2 + $0x50] sm:$0xf] 0
      %258 = vst [vmem:[#allocation2 + $0x64] sm:$0xf] 0
      %259 = vst [vmem:[#allocation2 + $0x78] sm:$0xf] 0
      %260 = vst [vmem:[#allocation2 + $0x8c] sm:$0xf] 0
      %vm261 = vcmask 1043712
      %vm262 = vcmask 261124
      %vm263 = vmor %vm262, %vm261
      %264 = vst.msk [vmem:[#allocation2 + $0xc] sm:$0xff] %vm263, 0
      %265 = vst.msk [vmem:[#allocation2 + $0x20] sm:$0xff] %vm263, 0
      %266 = vst.msk [vmem:[#allocation2 + $0x34] sm:$0xff] %vm263, 0
      %267 = vst.msk [vmem:[#allocation2 + $0x48] sm:$0xff] %vm263, 0
      %268 = vst.msk [vmem:[#allocation2 + $0x5c] sm:$0xff] %vm263, 0
      %269 = vst.msk [vmem:[#allocation2 + $0x70] sm:$0xff] %vm263, 0
      %270 = vst.msk [vmem:[#allocation2 + $0x84] sm:$0xff] %vm263, 0
      %271 = vst.msk [vmem:[#allocation2 + $0x98] sm:$0xff] %vm263, 0
      %v272 = vld [vmem:[%s1] sm:$0xf]
      %v273 = vld [vmem:[%s1 + $0x4] sm:$0xf]
      %v274 = vld [vmem:[%s1 + $0x8] sm:$0xf]
      %v275 = vld [vmem:[%s1 + $0xc] sm:$0xf]
      %v276 = vld [vmem:[%s1 + $0x10] sm:$0xf]
      %v277 = vld [vmem:[%s1 + $0x14] sm:$0xf]
      %v278 = vld [vmem:[%s1 + $0x18] sm:$0xf]
      %v279 = vld [vmem:[%s1 + $0x1c] sm:$0xf]
      %v280 = vld [vmem:[%s246] sm:$0xff]
      %v281 = vld [vmem:[%s246 + $0x8] sm:$0xf]
      %v282 = vld [vmem:[%s246 + $0xc] sm:$0xff]
      %v283 = vld [vmem:[%s246 + $0x14] sm:$0xf]
      %v284 = vld [vmem:[%s246 + $0x18] sm:$0xff]
      %v285 = vld [vmem:[%s246 + $0x20] sm:$0xf]
      %v286 = vld [vmem:[%s246 + $0x24] sm:$0xff]
      %v287 = vld [vmem:[%s246 + $0x2c] sm:$0xf]
      %v288 = vld [vmem:[%s246 + $0x30] sm:$0x33]
      %v289 = vld [vmem:[%s246 + $0x38] sm:$0x3]
      %v290 = vld [vmem:[%s2] sm:$0xff]
      %v291 = vld [vmem:[%s2 + $0x8] sm:$0xff]
      %v292 = vld [vmem:[%s2 + $0x10] sm:$0xff]
      %v293 = vld [vmem:[%s2 + $0x18] sm:$0xff]
      %v294 = vld [vmem:[%s2 + $0x20] sm:$0xff]
      %v295 = vld [vmem:[%s2 + $0x28] sm:$0xff]
      %v296 = vld [vmem:[%s2 + $0x30] sm:$0xff]
      %v297 = vld [vmem:[%s2 + $0x38] sm:$0xff]
      %299 = vset.pattern.permute.xlu0 0
      %300 = vperm.xlu0 %299, %v290
      %v301 = vpop.permute.xlu0 %300
      %304 = vset.pattern.permute.xlu0 0
      %305 = vperm.xlu0 %304, %v291
      %v306 = vpop.permute.xlu0 %305
      %309 = vset.pattern.permute.xlu0 0
      %310 = vperm.xlu0 %309, %v292
      %v311 = vpop.permute.xlu0 %310
      %314 = vset.pattern.permute.xlu0 0
      %315 = vperm.xlu0 %314, %v293
      %v316 = vpop.permute.xlu0 %315
      %319 = vset.pattern.permute.xlu0 0
      %320 = vperm.xlu0 %319, %v294
      %v321 = vpop.permute.xlu0 %320
      %324 = vset.pattern.permute.xlu0 0
      %325 = vperm.xlu0 %324, %v295
      %v326 = vpop.permute.xlu0 %325
      %329 = vset.pattern.permute.xlu0 0
      %330 = vperm.xlu0 %329, %v296
      %v331 = vpop.permute.xlu0 %330
      %334 = vset.pattern.permute.xlu0 0
      %335 = vperm.xlu0 %334, %v297
      %v336 = vpop.permute.xlu0 %335
      %v346 = vunpack.c.l.b16 %v272
      %v347 = vunpack.c.l.b16 %v273
      %v348 = vunpack.c.l.b16 %v274
      %v349 = vunpack.c.l.b16 %v275
      %v350 = vunpack.c.l.b16 %v276
      %v351 = vunpack.c.l.b16 %v277
      %v352 = vunpack.c.l.b16 %v278
      %v353 = vunpack.c.l.b16 %v279
      %v354 = vpack.c.b16 %v347, %v346
      %v355 = vpack.c.b16 %v349, %v348
      %v356 = vpack.c.b16 %v351, %v350
      %v357 = vpack.c.b16 %v353, %v352
      %v368 = vunpack.c.l.b16 %v280
      %v369 = vunpack.c.h.b16 %v280
      %v370 = vunpack.c.l.b16 %v281
      %v371 = vunpack.c.l.b16 %v282
      %v372 = vunpack.c.h.b16 %v282
      %v373 = vunpack.c.l.b16 %v283
      %v374 = vunpack.c.l.b16 %v284
      %v375 = vunpack.c.h.b16 %v284
      %v376 = vunpack.c.l.b16 %v285
      %v377 = vunpack.c.l.b16 %v286
      %v378 = vunpack.c.h.b16 %v286
      %v379 = vunpack.c.l.b16 %v287
      %v380 = vunpack.c.l.b16 %v288
      %v381 = vunpack.c.h.b16 %v288
      %v382 = vunpack.c.l.b16 %v289
      %v383 = vpack.c.b16 %v371, %v368
      %v384 = vpack.c.b16 %v372, %v369
      %v385 = vpack.c.b16 %v373, %v370
      %v386 = vpack.c.b16 %v377, %v374
      %v387 = vpack.c.b16 %v378, %v375
      %v388 = vpack.c.b16 %v379, %v376
      %v389 = vpack.c.b16 %v380, %v380
      %v390 = vpack.c.b16 %v381, %v381
      %v391 = vpack.c.b16 %v382, %v382
      %vm398 = vcmask 293888
      %v400 = vsel %vm398, %v354, 0
      %v403 = vsel %vm398, %v355, 0
      %v406 = vsel %vm398, %v356, 0
      %v409 = vsel %vm398, %v357, 0
      %vm411 = vcmask 1041408
      %v413 = vsel %vm411, %v389, 0
      %v416 = vsel %vm411, %v390, 0
      %v419 = vsel %vm411, %v391, 0
      %421 = vmatpush.bf16.msra.mxu0 0
      %422 = vmatpush.bf16.msra.mxu0 0
      %423 = vmatpush.bf16.msra.mxu0 0
      %424 = vmatpush.bf16.msra.mxu0 0
      %425 = vmatpush.bf16.msra.mxu0 0
      %426 = vmatpush.bf16.msra.mxu0 %v413
      %427 = vmatpush.bf16.msra.mxu0 %v386
      %428 = vmatpush.bf16.msra.mxu0 %v383
      %429 = vmatmul.bf16.gmra.mxu0 %v400
      %v430 = vpop.f32.mrf.mxu0
      %v431 = vadd.f32 %v301, %v430
      %v432 = vpop.f32.mrf.mxu0
      %v433 = vadd.f32 %v306, %v432
      %434 = vmatmul.bf16.gmra.mxu0 %v403
      %v435 = vpop.f32.mrf.mxu0
      %v436 = vadd.f32 %v311, %v435
      %v437 = vpop.f32.mrf.mxu0
      %v438 = vadd.f32 %v316, %v437
      %439 = vmatmul.bf16.gmra.mxu0 %v406
      %v440 = vpop.f32.mrf.mxu0
      %v441 = vadd.f32 %v321, %v440
      %v442 = vpop.f32.mrf.mxu0
      %v443 = vadd.f32 %v326, %v442
      %444 = vmatmul.bf16.gmra.mxu0 %v409
      %v445 = vpop.f32.mrf.mxu0
      %v446 = vadd.f32 %v331, %v445
      %v447 = vpop.f32.mrf.mxu0
      %v448 = vadd.f32 %v336, %v447
      %449 = vdwg.mxu0
      %450 = vmatpush.bf16.msra.mxu0 0
      %451 = vmatpush.bf16.msra.mxu0 0
      %452 = vmatpush.bf16.msra.mxu0 0
      %453 = vmatpush.bf16.msra.mxu0 0
      %454 = vmatpush.bf16.msra.mxu0 0
      %455 = vmatpush.bf16.msra.mxu0 %v416
      %456 = vmatpush.bf16.msra.mxu0 %v387
      %457 = vmatpush.bf16.msra.mxu0 %v384
      %458 = vmatmul.bf16.gmra.mxu0 %v400
      %v459 = vpop.f32.mrf.mxu0
      %v460 = vadd.f32 %v301, %v459
      %v461 = vpop.f32.mrf.mxu0
      %v462 = vadd.f32 %v306, %v461
      %463 = vmatmul.bf16.gmra.mxu0 %v403
      %v464 = vpop.f32.mrf.mxu0
      %v465 = vadd.f32 %v311, %v464
      %v466 = vpop.f32.mrf.mxu0
      %v467 = vadd.f32 %v316, %v466
      %468 = vmatmul.bf16.gmra.mxu0 %v406
      %v469 = vpop.f32.mrf.mxu0
      %v470 = vadd.f32 %v321, %v469
      %v471 = vpop.f32.mrf.mxu0
      %v472 = vadd.f32 %v326, %v471
      %473 = vmatmul.bf16.gmra.mxu0 %v409
      %v474 = vpop.f32.mrf.mxu0
      %v475 = vadd.f32 %v331, %v474
      %v476 = vpop.f32.mrf.mxu0
      %v477 = vadd.f32 %v336, %v476
      %478 = vdwg.mxu0
      %479 = vmatpush.bf16.msra.mxu0 0
      %480 = vmatpush.bf16.msra.mxu0 0
      %481 = vmatpush.bf16.msra.mxu0 0
      %482 = vmatpush.bf16.msra.mxu0 0
      %483 = vmatpush.bf16.msra.mxu0 0
      %484 = vmatpush.bf16.msra.mxu0 %v419
      %485 = vmatpush.bf16.msra.mxu0 %v388
      %486 = vmatpush.bf16.msra.mxu0 %v385
      %487 = vmatmul.bf16.gmra.mxu0 %v400
      %v488 = vpop.f32.mrf.mxu0
      %v489 = vadd.f32 %v301, %v488
      %v490 = vpop.f32.mrf.mxu0
      %v491 = vadd.f32 %v306, %v490
      %492 = vmatmul.bf16.gmra.mxu0 %v403
      %v493 = vpop.f32.mrf.mxu0
      %v494 = vadd.f32 %v311, %v493
      %v495 = vpop.f32.mrf.mxu0
      %v496 = vadd.f32 %v316, %v495
      %497 = vmatmul.bf16.gmra.mxu0 %v406
      %v498 = vpop.f32.mrf.mxu0
      %v499 = vadd.f32 %v321, %v498
      %v500 = vpop.f32.mrf.mxu0
      %v501 = vadd.f32 %v326, %v500
      %502 = vmatmul.bf16.gmra.mxu0 %v409
      %v503 = vpop.f32.mrf.mxu0
      %v504 = vadd.f32 %v331, %v503
      %v505 = vpop.f32.mrf.mxu0
      %v506 = vadd.f32 %v336, %v505
      %507 = vdwg.mxu0
      %v508 = vmax.f32 %v431, 0.0
      %v509 = vmax.f32 %v460, 0.0
      %v510 = vmax.f32 %v489, 0.0
      %v511 = vmax.f32 %v433, 0.0
      %v512 = vmax.f32 %v462, 0.0
      %v513 = vmax.f32 %v491, 0.0
      %v514 = vmax.f32 %v436, 0.0
      %v515 = vmax.f32 %v465, 0.0
      %v516 = vmax.f32 %v494, 0.0
      %v517 = vmax.f32 %v438, 0.0
      %v518 = vmax.f32 %v467, 0.0
      %v519 = vmax.f32 %v496, 0.0
      %v520 = vmax.f32 %v441, 0.0
      %v521 = vmax.f32 %v470, 0.0
      %v522 = vmax.f32 %v499, 0.0
      %v523 = vmax.f32 %v443, 0.0
      %v524 = vmax.f32 %v472, 0.0
      %v525 = vmax.f32 %v501, 0.0
      %v526 = vmax.f32 %v446, 0.0
      %v527 = vmax.f32 %v475, 0.0
      %v528 = vmax.f32 %v504, 0.0
      %v529 = vmax.f32 %v448, 0.0
      %v530 = vmax.f32 %v477, 0.0
      %v531 = vmax.f32 %v506, 0.0
      %v532 = vld [vmem:[%s5] sm:$0x7]
      %v534 = vperm.slane %v532, 0
      %v535 = vperm.slane %v532, 1
      %v536 = vperm.slane %v532, 2
      %v540 = vmul.f32 %v508, %v534
      %v541 = vmul.f32 %v509, %v535
      %v542 = vmul.f32 %v510, %v536
      %v543 = vmul.f32 %v511, %v534
      %v544 = vmul.f32 %v512, %v535
      %v545 = vmul.f32 %v513, %v536
      %v546 = vmul.f32 %v514, %v534
      %v547 = vmul.f32 %v515, %v535
      %v548 = vmul.f32 %v516, %v536
      %v549 = vmul.f32 %v517, %v534
      %v550 = vmul.f32 %v518, %v535
      %v551 = vmul.f32 %v519, %v536
      %v552 = vmul.f32 %v520, %v534
      %v553 = vmul.f32 %v521, %v535
      %v554 = vmul.f32 %v522, %v536
      %v555 = vmul.f32 %v523, %v534
      %v556 = vmul.f32 %v524, %v535
      %v557 = vmul.f32 %v525, %v536
      %v558 = vmul.f32 %v526, %v534
      %v559 = vmul.f32 %v527, %v535
      %v560 = vmul.f32 %v528, %v536
      %v561 = vmul.f32 %v529, %v534
      %v562 = vmul.f32 %v530, %v535
      %v563 = vmul.f32 %v531, %v536
      %v564 = vpack.c.bf16 %v541, %v540
      %v565 = vpack.c.bf16 %v542, %v542
      %v566 = vpack.c.bf16 %v544, %v543
      %v567 = vpack.c.bf16 %v545, %v545
      %v568 = vpack.c.bf16 %v547, %v546
      %v569 = vpack.c.bf16 %v548, %v548
      %v570 = vpack.c.bf16 %v550, %v549
      %v571 = vpack.c.bf16 %v551, %v551
      %v572 = vpack.c.bf16 %v553, %v552
      %v573 = vpack.c.bf16 %v554, %v554
      %v574 = vpack.c.bf16 %v556, %v555
      %v575 = vpack.c.bf16 %v557, %v557
      %v576 = vpack.c.bf16 %v559, %v558
      %v577 = vpack.c.bf16 %v560, %v560
      %v578 = vpack.c.bf16 %v562, %v561
      %v579 = vpack.c.bf16 %v563, %v563
      %580 = vst [vmem:[#allocation2 + $0x4] sm:$0xff] %v564
      %vm581 = vcmask 257024
      %582 = vst.msk [vmem:[#allocation2 + $0xc] sm:$0xf] %vm581, %v565
      %583 = vst [vmem:[#allocation2 + $0x18] sm:$0xff] %v566
      %584 = vst.msk [vmem:[#allocation2 + $0x20] sm:$0xf] %vm581, %v567
      %585 = vst [vmem:[#allocation2 + $0x2c] sm:$0xff] %v568
      %586 = vst.msk [vmem:[#allocation2 + $0x34] sm:$0xf] %vm581, %v569
      %587 = vst [vmem:[#allocation2 + $0x40] sm:$0xff] %v570
      %588 = vst.msk [vmem:[#allocation2 + $0x48] sm:$0xf] %vm581, %v571
      %589 = vst [vmem:[#allocation2 + $0x54] sm:$0xff] %v572
      %590 = vst.msk [vmem:[#allocation2 + $0x5c] sm:$0xf] %vm581, %v573
      %591 = vst [vmem:[#allocation2 + $0x68] sm:$0xff] %v574
      %592 = vst.msk [vmem:[#allocation2 + $0x70] sm:$0xf] %vm581, %v575
      %593 = vst [vmem:[#allocation2 + $0x7c] sm:$0xff] %v576
      %594 = vst.msk [vmem:[#allocation2 + $0x84] sm:$0xf] %vm581, %v577
      %595 = vst [vmem:[#allocation2 + $0x90] sm:$0xff] %v578
      %596 = vst.msk [vmem:[#allocation2 + $0x98] sm:$0xf] %vm581, %v579
      %v597 = vld [vmem:[#allocation2] sm:$0xff]
      %v598 = vld [vmem:[#allocation2 + $0x8] sm:$0xff]
      %v599 = vld [vmem:[#allocation2 + $0x14] sm:$0xff]
      %v600 = vld [vmem:[#allocation2 + $0x1c] sm:$0xff]
      %v601 = vld [vmem:[#allocation2 + $0x28] sm:$0xff]
      %v602 = vld [vmem:[#allocation2 + $0x30] sm:$0xff]
      %v603 = vld [vmem:[#allocation2 + $0x3c] sm:$0xff]
      %v604 = vld [vmem:[#allocation2 + $0x44] sm:$0xff]
      %v605 = vld [vmem:[#allocation2 + $0x50] sm:$0xff]
      %v606 = vld [vmem:[#allocation2 + $0x58] sm:$0xff]
      %v607 = vld [vmem:[#allocation2 + $0x64] sm:$0xff]
      %v608 = vld [vmem:[#allocation2 + $0x6c] sm:$0xff]
      %v609 = vld [vmem:[#allocation2 + $0x78] sm:$0xff]
      %v610 = vld [vmem:[#allocation2 + $0x80] sm:$0xff]
      %v611 = vld [vmem:[#allocation2 + $0x8c] sm:$0xff]
      %v612 = vld [vmem:[#allocation2 + $0x94] sm:$0xff]
      %629 = vrot.lane.b32.xlu0 %v597, 19
      %v630 = vpop.permute.xlu0 %629
      %631 = vrot.lane.b32.xlu0 %v598, 19
      %v632 = vpop.permute.xlu0 %631
      %633 = vrot.lane.b32.xlu0 %v599, 19
      %v634 = vpop.permute.xlu0 %633
      %635 = vrot.lane.b32.xlu0 %v600, 19
      %v636 = vpop.permute.xlu0 %635
      %637 = vrot.lane.b32.xlu0 %v601, 19
      %v638 = vpop.permute.xlu0 %637
      %639 = vrot.lane.b32.xlu0 %v602, 19
      %v640 = vpop.permute.xlu0 %639
      %641 = vrot.lane.b32.xlu0 %v603, 19
      %v642 = vpop.permute.xlu0 %641
      %643 = vrot.lane.b32.xlu0 %v604, 19
      %v644 = vpop.permute.xlu0 %643
      %645 = vrot.lane.b32.xlu0 %v605, 19
      %v646 = vpop.permute.xlu0 %645
      %647 = vrot.lane.b32.xlu0 %v606, 19
      %v648 = vpop.permute.xlu0 %647
      %649 = vrot.lane.b32.xlu0 %v607, 19
      %v650 = vpop.permute.xlu0 %649
      %651 = vrot.lane.b32.xlu0 %v608, 19
      %v652 = vpop.permute.xlu0 %651
      %653 = vrot.lane.b32.xlu0 %v609, 19
      %v654 = vpop.permute.xlu0 %653
      %655 = vrot.lane.b32.xlu0 %v610, 19
      %v656 = vpop.permute.xlu0 %655
      %657 = vrot.lane.b32.xlu0 %v611, 19
      %v658 = vpop.permute.xlu0 %657
      %659 = vrot.lane.b32.xlu0 %v612, 19
      %v660 = vpop.permute.xlu0 %659
      %v661 = vrot.slane %v630, 4
      %v662 = vrot.slane %v632, 4
      %v663 = vrot.slane %v634, 4
      %v664 = vrot.slane %v636, 4
      %v665 = vrot.slane %v638, 4
      %v666 = vrot.slane %v640, 4
      %v667 = vrot.slane %v642, 4
      %v668 = vrot.slane %v644, 4
      %v669 = vrot.slane %v646, 4
      %v670 = vrot.slane %v648, 4
      %v671 = vrot.slane %v650, 4
      %v672 = vrot.slane %v652, 4
      %v673 = vrot.slane %v654, 4
      %v674 = vrot.slane %v656, 4
      %v675 = vrot.slane %v658, 4
      %v676 = vrot.slane %v660, 4
      %vm677 = vcmask 1043456
      %v678 = vsel %vm677, %v661, %v662
      %vm679 = vcmask 154624
      %v680 = vsel %vm679, %v630, %v678
      %v681 = vsel %vm679, %v632, %v662
      %v682 = vsel %vm677, %v663, %v664
      %v683 = vsel %vm679, %v634, %v682
      %v684 = vsel %vm679, %v636, %v664
      %v685 = vsel %vm677, %v665, %v666
      %v686 = vsel %vm679, %v638, %v685
      %v687 = vsel %vm679, %v640, %v666
      %v688 = vsel %vm677, %v667, %v668
      %v689 = vsel %vm679, %v642, %v688
      %v690 = vsel %vm679, %v644, %v668
      %v691 = vsel %vm677, %v669, %v670
      %v692 = vsel %vm679, %v646, %v691
      %v693 = vsel %vm679, %v648, %v670
      %v694 = vsel %vm677, %v671, %v672
      %v695 = vsel %vm679, %v650, %v694
      %v696 = vsel %vm679, %v652, %v672
      %v697 = vsel %vm677, %v673, %v674
      %v698 = vsel %vm679, %v654, %v697
      %v699 = vsel %vm679, %v656, %v674
      %v700 = vsel %vm677, %v675, %v676
      %v701 = vsel %vm679, %v658, %v700
      %v702 = vsel %vm679, %v660, %v676
      %719 = vst [vmem:[#allocation3] sm:$0xff] %v680
      %720 = vst.msk [vmem:[#allocation3 + $0x8] sm:$0xf] %vm581, %v681
      %721 = vst [vmem:[#allocation3 + $0xc] sm:$0xff] %v683
      %722 = vst.msk [vmem:[#allocation3 + $0x14] sm:$0xf] %vm581, %v684
      %723 = vst [vmem:[#allocation3 + $0x18] sm:$0xff] %v686
      %724 = vst.msk [vmem:[#allocation3 + $0x20] sm:$0xf] %vm581, %v687
      %725 = vst [vmem:[#allocation3 + $0x24] sm:$0xff] %v689
      %726 = vst.msk [vmem:[#allocation3 + $0x2c] sm:$0xf] %vm581, %v690
      %727 = vst [vmem:[#allocation3 + $0x30] sm:$0xff] %v692
      %728 = vst.msk [vmem:[#allocation3 + $0x38] sm:$0xf] %vm581, %v693
      %729 = vst [vmem:[#allocation3 + $0x3c] sm:$0xff] %v695
      %730 = vst.msk [vmem:[#allocation3 + $0x44] sm:$0xf] %vm581, %v696
      %731 = vst [vmem:[#allocation3 + $0x48] sm:$0xff] %v698
      %732 = vst.msk [vmem:[#allocation3 + $0x50] sm:$0xf] %vm581, %v699
      %733 = vst [vmem:[#allocation3 + $0x54] sm:$0xff] %v701
      %734 = vst.msk [vmem:[#allocation3 + $0x5c] sm:$0xf] %vm581, %v702
      %v735 = vld [vmem:[#allocation2] sm:$0xff]
      %v736 = vld [vmem:[#allocation2 + $0x8] sm:$0xff]
      %v737 = vld [vmem:[#allocation2 + $0x14] sm:$0xff]
      %v738 = vld [vmem:[#allocation2 + $0x1c] sm:$0xff]
      %v739 = vld [vmem:[#allocation2 + $0x28] sm:$0xff]
      %v740 = vld [vmem:[#allocation2 + $0x30] sm:$0xff]
      %v741 = vld [vmem:[#allocation2 + $0x3c] sm:$0xff]
      %v742 = vld [vmem:[#allocation2 + $0x44] sm:$0xff]
      %v743 = vld [vmem:[#allocation2 + $0x50] sm:$0xff]
      %v744 = vld [vmem:[#allocation2 + $0x58] sm:$0xff]
      %v745 = vld [vmem:[#allocation2 + $0x64] sm:$0xff]
      %v746 = vld [vmem:[#allocation2 + $0x6c] sm:$0xff]
      %v747 = vld [vmem:[#allocation2 + $0x78] sm:$0xff]
      %v748 = vld [vmem:[#allocation2 + $0x80] sm:$0xff]
      %v749 = vld [vmem:[#allocation2 + $0x8c] sm:$0xff]
      %v750 = vld [vmem:[#allocation2 + $0x94] sm:$0xff]
      %767 = vrot.lane.b32.xlu0 %v735, 18
      %v768 = vpop.permute.xlu0 %767
      %769 = vrot.lane.b32.xlu0 %v736, 18
      %v770 = vpop.permute.xlu0 %769
      %771 = vrot.lane.b32.xlu0 %v737, 18
      %v772 = vpop.permute.xlu0 %771
      %773 = vrot.lane.b32.xlu0 %v738, 18
      %v774 = vpop.permute.xlu0 %773
      %775 = vrot.lane.b32.xlu0 %v739, 18
      %v776 = vpop.permute.xlu0 %775
      %777 = vrot.lane.b32.xlu0 %v740, 18
      %v778 = vpop.permute.xlu0 %777
      %779 = vrot.lane.b32.xlu0 %v741, 18
      %v780 = vpop.permute.xlu0 %779
      %781 = vrot.lane.b32.xlu0 %v742, 18
      %v782 = vpop.permute.xlu0 %781
      %783 = vrot.lane.b32.xlu0 %v743, 18
      %v784 = vpop.permute.xlu0 %783
      %785 = vrot.lane.b32.xlu0 %v744, 18
      %v786 = vpop.permute.xlu0 %785
      %787 = vrot.lane.b32.xlu0 %v745, 18
      %v788 = vpop.permute.xlu0 %787
      %789 = vrot.lane.b32.xlu0 %v746, 18
      %v790 = vpop.permute.xlu0 %789
      %791 = vrot.lane.b32.xlu0 %v747, 18
      %v792 = vpop.permute.xlu0 %791
      %793 = vrot.lane.b32.xlu0 %v748, 18
      %v794 = vpop.permute.xlu0 %793
      %795 = vrot.lane.b32.xlu0 %v749, 18
      %v796 = vpop.permute.xlu0 %795
      %797 = vrot.lane.b32.xlu0 %v750, 18
      %v798 = vpop.permute.xlu0 %797
      %v799 = vrot.slane %v768, 4
      %v800 = vrot.slane %v770, 4
      %v801 = vrot.slane %v772, 4
      %v802 = vrot.slane %v774, 4
      %v803 = vrot.slane %v776, 4
      %v804 = vrot.slane %v778, 4
      %v805 = vrot.slane %v780, 4
      %v806 = vrot.slane %v782, 4
      %v807 = vrot.slane %v784, 4
      %v808 = vrot.slane %v786, 4
      %v809 = vrot.slane %v788, 4
      %v810 = vrot.slane %v790, 4
      %v811 = vrot.slane %v792, 4
      %v812 = vrot.slane %v794, 4
      %v813 = vrot.slane %v796, 4
      %v814 = vrot.slane %v798, 4
      %v815 = vsel %vm677, %v799, %v800
      %vm816 = vcmask 146432
      %v817 = vsel %vm816, %v768, %v815
      %v818 = vsel %vm816, %v770, %v800
      %v819 = vsel %vm677, %v801, %v802
      %v820 = vsel %vm816, %v772, %v819
      %v821 = vsel %vm816, %v774, %v802
      %v822 = vsel %vm677, %v803, %v804
      %v823 = vsel %vm816, %v776, %v822
      %v824 = vsel %vm816, %v778, %v804
      %v825 = vsel %vm677, %v805, %v806
      %v826 = vsel %vm816, %v780, %v825
      %v827 = vsel %vm816, %v782, %v806
      %v828 = vsel %vm677, %v807, %v808
      %v829 = vsel %vm816, %v784, %v828
      %v830 = vsel %vm816, %v786, %v808
      %v831 = vsel %vm677, %v809, %v810
      %v832 = vsel %vm816, %v788, %v831
      %v833 = vsel %vm816, %v790, %v810
      %v834 = vsel %vm677, %v811, %v812
      %v835 = vsel %vm816, %v792, %v834
      %v836 = vsel %vm816, %v794, %v812
      %v837 = vsel %vm677, %v813, %v814
      %v838 = vsel %vm816, %v796, %v837
      %v839 = vsel %vm816, %v798, %v814
      %856 = vst [vmem:[#allocation3 + $0x60] sm:$0xff] %v817
      %857 = vst.msk [vmem:[#allocation3 + $0x68] sm:$0xf] %vm581, %v818
      %858 = vst [vmem:[#allocation3 + $0x6c] sm:$0xff] %v820
      %859 = vst.msk [vmem:[#allocation3 + $0x74] sm:$0xf] %vm581, %v821
      %860 = vst [vmem:[#allocation3 + $0x78] sm:$0xff] %v823
      %861 = vst.msk [vmem:[#allocation3 + $0x80] sm:$0xf] %vm581, %v824
      %862 = vst [vmem:[#allocation3 + $0x84] sm:$0xff] %v826
      %863 = vst.msk [vmem:[#allocation3 + $0x8c] sm:$0xf] %vm581, %v827
      %864 = vst [vmem:[#allocation3 + $0x90] sm:$0xff] %v829
      %865 = vst.msk [vmem:[#allocation3 + $0x98] sm:$0xf] %vm581, %v830
      %866 = vst [vmem:[#allocation3 + $0x9c] sm:$0xff] %v832
      %867 = vst.msk [vmem:[#allocation3 + $0xa4] sm:$0xf] %vm581, %v833
      %868 = vst [vmem:[#allocation3 + $0xa8] sm:$0xff] %v835
      %869 = vst.msk [vmem:[#allocation3 + $0xb0] sm:$0xf] %vm581, %v836
      %870 = vst [vmem:[#allocation3 + $0xb4] sm:$0xff] %v838
      %871 = vst.msk [vmem:[#allocation3 + $0xbc] sm:$0xf] %vm581, %v839
      %v872 = vld [vmem:[#allocation2] sm:$0xff]
      %v873 = vld [vmem:[#allocation2 + $0x8] sm:$0xff]
      %v874 = vld [vmem:[#allocation2 + $0x14] sm:$0xff]
      %v875 = vld [vmem:[#allocation2 + $0x1c] sm:$0xff]
      %v876 = vld [vmem:[#allocation2 + $0x28] sm:$0xff]
      %v877 = vld [vmem:[#allocation2 + $0x30] sm:$0xff]
      %v878 = vld [vmem:[#allocation2 + $0x3c] sm:$0xff]
      %v879 = vld [vmem:[#allocation2 + $0x44] sm:$0xff]
      %v880 = vld [vmem:[#allocation2 + $0x50] sm:$0xff]
      %v881 = vld [vmem:[#allocation2 + $0x58] sm:$0xff]
      %v882 = vld [vmem:[#allocation2 + $0x64] sm:$0xff]
      %v883 = vld [vmem:[#allocation2 + $0x6c] sm:$0xff]
      %v884 = vld [vmem:[#allocation2 + $0x78] sm:$0xff]
      %v885 = vld [vmem:[#allocation2 + $0x80] sm:$0xff]
      %v886 = vld [vmem:[#allocation2 + $0x8c] sm:$0xff]
      %v887 = vld [vmem:[#allocation2 + $0x94] sm:$0xff]
      %904 = vrot.lane.b32.xlu0 %v872, 17
      %v905 = vpop.permute.xlu0 %904
      %906 = vrot.lane.b32.xlu0 %v873, 17
      %v907 = vpop.permute.xlu0 %906
      %908 = vrot.lane.b32.xlu0 %v874, 17
      %v909 = vpop.permute.xlu0 %908
      %910 = vrot.lane.b32.xlu0 %v875, 17
      %v911 = vpop.permute.xlu0 %910
      %912 = vrot.lane.b32.xlu0 %v876, 17
      %v913 = vpop.permute.xlu0 %912
      %914 = vrot.lane.b32.xlu0 %v877, 17
      %v915 = vpop.permute.xlu0 %914
      %916 = vrot.lane.b32.xlu0 %v878, 17
      %v917 = vpop.permute.xlu0 %916
      %918 = vrot.lane.b32.xlu0 %v879, 17
      %v919 = vpop.permute.xlu0 %918
      %920 = vrot.lane.b32.xlu0 %v880, 17
      %v921 = vpop.permute.xlu0 %920
      %922 = vrot.lane.b32.xlu0 %v881, 17
      %v923 = vpop.permute.xlu0 %922
      %924 = vrot.lane.b32.xlu0 %v882, 17
      %v925 = vpop.permute.xlu0 %924
      %926 = vrot.lane.b32.xlu0 %v883, 17
      %v927 = vpop.permute.xlu0 %926
      %928 = vrot.lane.b32.xlu0 %v884, 17
      %v929 = vpop.permute.xlu0 %928
      %930 = vrot.lane.b32.xlu0 %v885, 17
      %v931 = vpop.permute.xlu0 %930
      %932 = vrot.lane.b32.xlu0 %v886, 17
      %v933 = vpop.permute.xlu0 %932
      %934 = vrot.lane.b32.xlu0 %v887, 17
      %v935 = vpop.permute.xlu0 %934
      %v936 = vrot.slane %v905, 4
      %v937 = vrot.slane %v907, 4
      %v938 = vrot.slane %v909, 4
      %v939 = vrot.slane %v911, 4
      %v940 = vrot.slane %v913, 4
      %v941 = vrot.slane %v915, 4
      %v942 = vrot.slane %v917, 4
      %v943 = vrot.slane %v919, 4
      %v944 = vrot.slane %v921, 4
      %v945 = vrot.slane %v923, 4
      %v946 = vrot.slane %v925, 4
      %v947 = vrot.slane %v927, 4
      %v948 = vrot.slane %v929, 4
      %v949 = vrot.slane %v931, 4
      %v950 = vrot.slane %v933, 4
      %v951 = vrot.slane %v935, 4
      %v952 = vsel %vm677, %v936, %v937
      %vm953 = vcmask 138240
      %v954 = vsel %vm953, %v905, %v952
      %v955 = vsel %vm953, %v907, %v937
      %v956 = vsel %vm677, %v938, %v939
      %v957 = vsel %vm953, %v909, %v956
      %v958 = vsel %vm953, %v911, %v939
      %v959 = vsel %vm677, %v940, %v941
      %v960 = vsel %vm953, %v913, %v959
      %v961 = vsel %vm953, %v915, %v941
      %v962 = vsel %vm677, %v942, %v943
      %v963 = vsel %vm953, %v917, %v962
      %v964 = vsel %vm953, %v919, %v943
      %v965 = vsel %vm677, %v944, %v945
      %v966 = vsel %vm953, %v921, %v965
      %v967 = vsel %vm953, %v923, %v945
      %v968 = vsel %vm677, %v946, %v947
      %v969 = vsel %vm953, %v925, %v968
      %v970 = vsel %vm953, %v927, %v947
      %v971 = vsel %vm677, %v948, %v949
      %v972 = vsel %vm953, %v929, %v971
      %v973 = vsel %vm953, %v931, %v949
      %v974 = vsel %vm677, %v950, %v951
      %v975 = vsel %vm953, %v933, %v974
      %v976 = vsel %vm953, %v935, %v951
      %993 = vst [vmem:[#allocation3 + $0xc0] sm:$0xff] %v954
      %994 = vst.msk [vmem:[#allocation3 + $0xc8] sm:$0xf] %vm581, %v955
      %995 = vst [vmem:[#allocation3 + $0xcc] sm:$0xff] %v957
      %996 = vst.msk [vmem:[#allocation3 + $0xd4] sm:$0xf] %vm581, %v958
      %997 = vst [vmem:[#allocation3 + $0xd8] sm:$0xff] %v960
      %998 = vst.msk [vmem:[#allocation3 + $0xe0] sm:$0xf] %vm581, %v961
      %999 = vst [vmem:[#allocation3 + $0xe4] sm:$0xff] %v963
      %1000 = vst.msk [vmem:[#allocation3 + $0xec] sm:$0xf] %vm581, %v964
      %1001 = vst [vmem:[#allocation3 + $0xf0] sm:$0xff] %v966
      %1002 = vst.msk [vmem:[#allocation3 + $0xf8] sm:$0xf] %vm581, %v967
      %1003 = vst [vmem:[#allocation3 + $0xfc] sm:$0xff] %v969
      %1004 = vst.msk [vmem:[#allocation3 + $0x104] sm:$0xf] %vm581, %v970
      %1005 = vst [vmem:[#allocation3 + $0x108] sm:$0xff] %v972
      %1006 = vst.msk [vmem:[#allocation3 + $0x110] sm:$0xf] %vm581, %v973
      %1007 = vst [vmem:[#allocation3 + $0x114] sm:$0xff] %v975
      %1008 = vst.msk [vmem:[#allocation3 + $0x11c] sm:$0xf] %vm581, %v976
      %v1009 = vld [vmem:[#allocation2] sm:$0xff]
      %v1010 = vld [vmem:[#allocation2 + $0x8] sm:$0xff]
      %v1011 = vld [vmem:[#allocation2 + $0x14] sm:$0xff]
      %v1012 = vld [vmem:[#allocation2 + $0x1c] sm:$0xff]
      %v1013 = vld [vmem:[#allocation2 + $0x28] sm:$0xff]
      %v1014 = vld [vmem:[#allocation2 + $0x30] sm:$0xff]
      %v1015 = vld [vmem:[#allocation2 + $0x3c] sm:$0xff]
      %v1016 = vld [vmem:[#allocation2 + $0x44] sm:$0xff]
      %v1017 = vld [vmem:[#allocation2 + $0x50] sm:$0xff]
      %v1018 = vld [vmem:[#allocation2 + $0x58] sm:$0xff]
      %v1019 = vld [vmem:[#allocation2 + $0x64] sm:$0xff]
      %v1020 = vld [vmem:[#allocation2 + $0x6c] sm:$0xff]
      %v1021 = vld [vmem:[#allocation2 + $0x78] sm:$0xff]
      %v1022 = vld [vmem:[#allocation2 + $0x80] sm:$0xff]
      %v1023 = vld [vmem:[#allocation2 + $0x8c] sm:$0xff]
      %v1024 = vld [vmem:[#allocation2 + $0x94] sm:$0xff]
      %1041 = vrot.lane.b32.xlu0 %v1009, 1
      %v1042 = vpop.permute.xlu0 %1041
      %1043 = vrot.lane.b32.xlu0 %v1010, 1
      %v1044 = vpop.permute.xlu0 %1043
      %1045 = vrot.lane.b32.xlu0 %v1011, 1
      %v1046 = vpop.permute.xlu0 %1045
      %1047 = vrot.lane.b32.xlu0 %v1012, 1
      %v1048 = vpop.permute.xlu0 %1047
      %1049 = vrot.lane.b32.xlu0 %v1013, 1
      %v1050 = vpop.permute.xlu0 %1049
      %1051 = vrot.lane.b32.xlu0 %v1014, 1
      %v1052 = vpop.permute.xlu0 %1051
      %1053 = vrot.lane.b32.xlu0 %v1015, 1
      %v1054 = vpop.permute.xlu0 %1053
      %1055 = vrot.lane.b32.xlu0 %v1016, 1
      %v1056 = vpop.permute.xlu0 %1055
      %1057 = vrot.lane.b32.xlu0 %v1017, 1
      %v1058 = vpop.permute.xlu0 %1057
      %1059 = vrot.lane.b32.xlu0 %v1018, 1
      %v1060 = vpop.permute.xlu0 %1059
      %1061 = vrot.lane.b32.xlu0 %v1019, 1
      %v1062 = vpop.permute.xlu0 %1061
      %1063 = vrot.lane.b32.xlu0 %v1020, 1
      %v1064 = vpop.permute.xlu0 %1063
      %1065 = vrot.lane.b32.xlu0 %v1021, 1
      %v1066 = vpop.permute.xlu0 %1065
      %1067 = vrot.lane.b32.xlu0 %v1022, 1
      %v1068 = vpop.permute.xlu0 %1067
      %1069 = vrot.lane.b32.xlu0 %v1023, 1
      %v1070 = vpop.permute.xlu0 %1069
      %1071 = vrot.lane.b32.xlu0 %v1024, 1
      %v1072 = vpop.permute.xlu0 %1071
      %v1073 = vrot.slane %v1042, 4
      %v1074 = vrot.slane %v1044, 4
      %v1075 = vrot.slane %v1046, 4
      %v1076 = vrot.slane %v1048, 4
      %v1077 = vrot.slane %v1050, 4
      %v1078 = vrot.slane %v1052, 4
      %v1079 = vrot.slane %v1054, 4
      %v1080 = vrot.slane %v1056, 4
      %v1081 = vrot.slane %v1058, 4
      %v1082 = vrot.slane %v1060, 4
      %v1083 = vrot.slane %v1062, 4
      %v1084 = vrot.slane %v1064, 4
      %v1085 = vrot.slane %v1066, 4
      %v1086 = vrot.slane %v1068, 4
      %v1087 = vrot.slane %v1070, 4
      %v1088 = vrot.slane %v1072, 4
      %v1089 = vsel %vm677, %v1073, %v1074
      %vm1090 = vcmask 7168
      %v1091 = vsel %vm1090, %v1042, %v1089
      %v1092 = vsel %vm1090, %v1044, %v1074
      %v1093 = vsel %vm677, %v1075, %v1076
      %v1094 = vsel %vm1090, %v1046, %v1093
      %v1095 = vsel %vm1090, %v1048, %v1076
      %v1096 = vsel %vm677, %v1077, %v1078
      %v1097 = vsel %vm1090, %v1050, %v1096
      %v1098 = vsel %vm1090, %v1052, %v1078
      %v1099 = vsel %vm677, %v1079, %v1080
      %v1100 = vsel %vm1090, %v1054, %v1099
      %v1101 = vsel %vm1090, %v1056, %v1080
      %v1102 = vsel %vm677, %v1081, %v1082
      %v1103 = vsel %vm1090, %v1058, %v1102
      %v1104 = vsel %vm1090, %v1060, %v1082
      %v1105 = vsel %vm677, %v1083, %v1084
      %v1106 = vsel %vm1090, %v1062, %v1105
      %v1107 = vsel %vm1090, %v1064, %v1084
      %v1108 = vsel %vm677, %v1085, %v1086
      %v1109 = vsel %vm1090, %v1066, %v1108
      %v1110 = vsel %vm1090, %v1068, %v1086
      %v1111 = vsel %vm677, %v1087, %v1088
      %v1112 = vsel %vm1090, %v1070, %v1111
      %v1113 = vsel %vm1090, %v1072, %v1088
      %1130 = vst [vmem:[#allocation3 + $0x120] sm:$0xff] %v1091
      %1131 = vst.msk [vmem:[#allocation3 + $0x128] sm:$0xf] %vm581, %v1092
      %1132 = vst [vmem:[#allocation3 + $0x12c] sm:$0xff] %v1094
      %1133 = vst.msk [vmem:[#allocation3 + $0x134] sm:$0xf] %vm581, %v1095
      %1134 = vst [vmem:[#allocation3 + $0x138] sm:$0xff] %v1097
      %1135 = vst.msk [vmem:[#allocation3 + $0x140] sm:$0xf] %vm581, %v1098
      %1136 = vst [vmem:[#allocation3 + $0x144] sm:$0xff] %v1100
      %1137 = vst.msk [vmem:[#allocation3 + $0x14c] sm:$0xf] %vm581, %v1101
      %1138 = vst [vmem:[#allocation3 + $0x150] sm:$0xff] %v1103
      %1139 = vst.msk [vmem:[#allocation3 + $0x158] sm:$0xf] %vm581, %v1104
      %1140 = vst [vmem:[#allocation3 + $0x15c] sm:$0xff] %v1106
      %1141 = vst.msk [vmem:[#allocation3 + $0x164] sm:$0xf] %vm581, %v1107
      %1142 = vst [vmem:[#allocation3 + $0x168] sm:$0xff] %v1109
      %1143 = vst.msk [vmem:[#allocation3 + $0x170] sm:$0xf] %vm581, %v1110
      %1144 = vst [vmem:[#allocation3 + $0x174] sm:$0xff] %v1112
      %1145 = vst.msk [vmem:[#allocation3 + $0x17c] sm:$0xf] %vm581, %v1113
      %v1146 = vld [vmem:[#allocation2 + $0x4] sm:$0xff]
      %v1147 = vld [vmem:[#allocation2 + $0xc] sm:$0xf]
      %v1148 = vld [vmem:[#allocation2 + $0x18] sm:$0xff]
      %v1149 = vld [vmem:[#allocation2 + $0x20] sm:$0xf]
      %v1150 = vld [vmem:[#allocation2 + $0x2c] sm:$0xff]
      %v1151 = vld [vmem:[#allocation2 + $0x34] sm:$0xf]
      %v1152 = vld [vmem:[#allocation2 + $0x40] sm:$0xff]
      %v1153 = vld [vmem:[#allocation2 + $0x48] sm:$0xf]
      %v1154 = vld [vmem:[#allocation2 + $0x54] sm:$0xff]
      %v1155 = vld [vmem:[#allocation2 + $0x5c] sm:$0xf]
      %v1156 = vld [vmem:[#allocation2 + $0x68] sm:$0xff]
      %v1157 = vld [vmem:[#allocation2 + $0x70] sm:$0xf]
      %v1158 = vld [vmem:[#allocation2 + $0x7c] sm:$0xff]
      %v1159 = vld [vmem:[#allocation2 + $0x84] sm:$0xf]
      %v1160 = vld [vmem:[#allocation2 + $0x90] sm:$0xff]
      %v1161 = vld [vmem:[#allocation2 + $0x98] sm:$0xf]
      %1162 = vst [vmem:[#allocation3 + $0x180] sm:$0xff] %v1146
      %1163 = vst.msk [vmem:[#allocation3 + $0x188] sm:$0xf] %vm581, %v1147
      %1164 = vst [vmem:[#allocation3 + $0x18c] sm:$0xff] %v1148
      %1165 = vst.msk [vmem:[#allocation3 + $0x194] sm:$0xf] %vm581, %v1149
      %1166 = vst [vmem:[#allocation3 + $0x198] sm:$0xff] %v1150
      %1167 = vst.msk [vmem:[#allocation3 + $0x1a0] sm:$0xf] %vm581, %v1151
      %1168 = vst [vmem:[#allocation3 + $0x1a4] sm:$0xff] %v1152
      %1169 = vst.msk [vmem:[#allocation3 + $0x1ac] sm:$0xf] %vm581, %v1153
      %1170 = vst [vmem:[#allocation3 + $0x1b0] sm:$0xff] %v1154
      %1171 = vst.msk [vmem:[#allocation3 + $0x1b8] sm:$0xf] %vm581, %v1155
      %1172 = vst [vmem:[#allocation3 + $0x1bc] sm:$0xff] %v1156
      %1173 = vst.msk [vmem:[#allocation3 + $0x1c4] sm:$0xf] %vm581, %v1157
      %1174 = vst [vmem:[#allocation3 + $0x1c8] sm:$0xff] %v1158
      %1175 = vst.msk [vmem:[#allocation3 + $0x1d0] sm:$0xf] %vm581, %v1159
      %1176 = vst [vmem:[#allocation3 + $0x1d4] sm:$0xff] %v1160
      %1177 = vst.msk [vmem:[#allocation3 + $0x1dc] sm:$0xf] %vm581, %v1161
      %v1178 = vld [vmem:[#allocation2 + $0x4] sm:$0xff]
      %v1179 = vld [vmem:[#allocation2 + $0xc] sm:$0xf]
      %v1180 = vld [vmem:[#allocation2 + $0x18] sm:$0xff]
      %v1181 = vld [vmem:[#allocation2 + $0x20] sm:$0xf]
      %v1182 = vld [vmem:[#allocation2 + $0x2c] sm:$0xff]
      %v1183 = vld [vmem:[#allocation2 + $0x34] sm:$0xf]
      %v1184 = vld [vmem:[#allocation2 + $0x40] sm:$0xff]
      %v1185 = vld [vmem:[#allocation2 + $0x48] sm:$0xf]
      %v1186 = vld [vmem:[#allocation2 + $0x54] sm:$0xff]
      %v1187 = vld [vmem:[#allocation2 + $0x5c] sm:$0xf]
      %v1188 = vld [vmem:[#allocation2 + $0x68] sm:$0xff]
      %v1189 = vld [vmem:[#allocation2 + $0x70] sm:$0xf]
      %v1190 = vld [vmem:[#allocation2 + $0x7c] sm:$0xff]
      %v1191 = vld [vmem:[#allocation2 + $0x84] sm:$0xf]
      %v1192 = vld [vmem:[#allocation2 + $0x90] sm:$0xff]
      %v1193 = vld [vmem:[#allocation2 + $0x98] sm:$0xf]
      %1210 = vrot.lane.b32.xlu0 %v1178, 127
      %v1211 = vpop.permute.xlu0 %1210
      %1212 = vrot.lane.b32.xlu0 %v1179, 127
      %v1213 = vpop.permute.xlu0 %1212
      %1214 = vrot.lane.b32.xlu0 %v1180, 127
      %v1215 = vpop.permute.xlu0 %1214
      %1216 = vrot.lane.b32.xlu0 %v1181, 127
      %v1217 = vpop.permute.xlu0 %1216
      %1218 = vrot.lane.b32.xlu0 %v1182, 127
      %v1219 = vpop.permute.xlu0 %1218
      %1220 = vrot.lane.b32.xlu0 %v1183, 127
      %v1221 = vpop.permute.xlu0 %1220
      %1222 = vrot.lane.b32.xlu0 %v1184, 127
      %v1223 = vpop.permute.xlu0 %1222
      %1224 = vrot.lane.b32.xlu0 %v1185, 127
      %v1225 = vpop.permute.xlu0 %1224
      %1226 = vrot.lane.b32.xlu0 %v1186, 127
      %v1227 = vpop.permute.xlu0 %1226
      %1228 = vrot.lane.b32.xlu0 %v1187, 127
      %v1229 = vpop.permute.xlu0 %1228
      %1230 = vrot.lane.b32.xlu0 %v1188, 127
      %v1231 = vpop.permute.xlu0 %1230
      %1232 = vrot.lane.b32.xlu0 %v1189, 127
      %v1233 = vpop.permute.xlu0 %1232
      %1234 = vrot.lane.b32.xlu0 %v1190, 127
      %v1235 = vpop.permute.xlu0 %1234
      %1236 = vrot.lane.b32.xlu0 %v1191, 127
      %v1237 = vpop.permute.xlu0 %1236
      %1238 = vrot.lane.b32.xlu0 %v1192, 127
      %v1239 = vpop.permute.xlu0 %1238
      %1240 = vrot.lane.b32.xlu0 %v1193, 127
      %v1241 = vpop.permute.xlu0 %1240
      %v1242 = vrot.slane %v1211, 4
      %v1243 = vrot.slane %v1213, 4
      %v1244 = vrot.slane %v1215, 4
      %v1245 = vrot.slane %v1217, 4
      %v1246 = vrot.slane %v1219, 4
      %v1247 = vrot.slane %v1221, 4
      %v1248 = vrot.slane %v1223, 4
      %v1249 = vrot.slane %v1225, 4
      %v1250 = vrot.slane %v1227, 4
      %v1251 = vrot.slane %v1229, 4
      %v1252 = vrot.slane %v1231, 4
      %v1253 = vrot.slane %v1233, 4
      %v1254 = vrot.slane %v1235, 4
      %v1255 = vrot.slane %v1237, 4
      %v1256 = vrot.slane %v1239, 4
      %v1257 = vrot.slane %v1241, 4
      %v1258 = vsel %vm677, %v1242, %v1243
      %vm1259 = vcmask 1039360
      %v1260 = vsel %vm1259, %v1211, %v1258
      %v1261 = vsel %vm677, %v1244, %v1245
      %v1262 = vsel %vm1259, %v1215, %v1261
      %v1263 = vsel %vm677, %v1246, %v1247
      %v1264 = vsel %vm1259, %v1219, %v1263
      %v1265 = vsel %vm677, %v1248, %v1249
      %v1266 = vsel %vm1259, %v1223, %v1265
      %v1267 = vsel %vm677, %v1250, %v1251
      %v1268 = vsel %vm1259, %v1227, %v1267
      %v1269 = vsel %vm677, %v1252, %v1253
      %v1270 = vsel %vm1259, %v1231, %v1269
      %v1271 = vsel %vm677, %v1254, %v1255
      %v1272 = vsel %vm1259, %v1235, %v1271
      %v1273 = vsel %vm677, %v1256, %v1257
      %v1274 = vsel %vm1259, %v1239, %v1273
      %1291 = vst [vmem:[#allocation3 + $0x1e0] sm:$0xff] %v1260
      %1292 = vst.msk [vmem:[#allocation3 + $0x1e8] sm:$0xf] %vm581, %v1213
      %1293 = vst [vmem:[#allocation3 + $0x1ec] sm:$0xff] %v1262
      %1294 = vst.msk [vmem:[#allocation3 + $0x1f4] sm:$0xf] %vm581, %v1217
      %1295 = vst [vmem:[#allocation3 + $0x1f8] sm:$0xff] %v1264
      %1296 = vst.msk [vmem:[#allocation3 + $0x200] sm:$0xf] %vm581, %v1221
      %1297 = vst [vmem:[#allocation3 + $0x204] sm:$0xff] %v1266
      %1298 = vst.msk [vmem:[#allocation3 + $0x20c] sm:$0xf] %vm581, %v1225
      %1299 = vst [vmem:[#allocation3 + $0x210] sm:$0xff] %v1268
      %1300 = vst.msk [vmem:[#allocation3 + $0x218] sm:$0xf] %vm581, %v1229
      %1301 = vst [vmem:[#allocation3 + $0x21c] sm:$0xff] %v1270
      %1302 = vst.msk [vmem:[#allocation3 + $0x224] sm:$0xf] %vm581, %v1233
      %1303 = vst [vmem:[#allocation3 + $0x228] sm:$0xff] %v1272
      %1304 = vst.msk [vmem:[#allocation3 + $0x230] sm:$0xf] %vm581, %v1237
      %1305 = vst [vmem:[#allocation3 + $0x234] sm:$0xff] %v1274
      %1306 = vst.msk [vmem:[#allocation3 + $0x23c] sm:$0xf] %vm581, %v1241
      %v1307 = vld [vmem:[#allocation2 + $0x4] sm:$0xff]
      %v1308 = vld [vmem:[#allocation2 + $0xc] sm:$0xf]
      %v1309 = vld [vmem:[#allocation2 + $0x18] sm:$0xff]
      %v1310 = vld [vmem:[#allocation2 + $0x20] sm:$0xf]
      %v1311 = vld [vmem:[#allocation2 + $0x2c] sm:$0xff]
      %v1312 = vld [vmem:[#allocation2 + $0x34] sm:$0xf]
      %v1313 = vld [vmem:[#allocation2 + $0x40] sm:$0xff]
      %v1314 = vld [vmem:[#allocation2 + $0x48] sm:$0xf]
      %v1315 = vld [vmem:[#allocation2 + $0x54] sm:$0xff]
      %v1316 = vld [vmem:[#allocation2 + $0x5c] sm:$0xf]
      %v1317 = vld [vmem:[#allocation2 + $0x68] sm:$0xff]
      %v1318 = vld [vmem:[#allocation2 + $0x70] sm:$0xf]
      %v1319 = vld [vmem:[#allocation2 + $0x7c] sm:$0xff]
      %v1320 = vld [vmem:[#allocation2 + $0x84] sm:$0xf]
      %v1321 = vld [vmem:[#allocation2 + $0x90] sm:$0xff]
      %v1322 = vld [vmem:[#allocation2 + $0x98] sm:$0xf]
      %1339 = vrot.lane.b32.xlu0 %v1307, 111
      %v1340 = vpop.permute.xlu0 %1339
      %1341 = vrot.lane.b32.xlu0 %v1308, 111
      %v1342 = vpop.permute.xlu0 %1341
      %1343 = vrot.lane.b32.xlu0 %v1309, 111
      %v1344 = vpop.permute.xlu0 %1343
      %1345 = vrot.lane.b32.xlu0 %v1310, 111
      %v1346 = vpop.permute.xlu0 %1345
      %1347 = vrot.lane.b32.xlu0 %v1311, 111
      %v1348 = vpop.permute.xlu0 %1347
      %1349 = vrot.lane.b32.xlu0 %v1312, 111
      %v1350 = vpop.permute.xlu0 %1349
      %1351 = vrot.lane.b32.xlu0 %v1313, 111
      %v1352 = vpop.permute.xlu0 %1351
      %1353 = vrot.lane.b32.xlu0 %v1314, 111
      %v1354 = vpop.permute.xlu0 %1353
      %1355 = vrot.lane.b32.xlu0 %v1315, 111
      %v1356 = vpop.permute.xlu0 %1355
      %1357 = vrot.lane.b32.xlu0 %v1316, 111
      %v1358 = vpop.permute.xlu0 %1357
      %1359 = vrot.lane.b32.xlu0 %v1317, 111
      %v1360 = vpop.permute.xlu0 %1359
      %1361 = vrot.lane.b32.xlu0 %v1318, 111
      %v1362 = vpop.permute.xlu0 %1361
      %1363 = vrot.lane.b32.xlu0 %v1319, 111
      %v1364 = vpop.permute.xlu0 %1363
      %1365 = vrot.lane.b32.xlu0 %v1320, 111
      %v1366 = vpop.permute.xlu0 %1365
      %1367 = vrot.lane.b32.xlu0 %v1321, 111
      %v1368 = vpop.permute.xlu0 %1367
      %1369 = vrot.lane.b32.xlu0 %v1322, 111
      %v1370 = vpop.permute.xlu0 %1369
      %v1371 = vrot.slane %v1340, 4
      %v1372 = vrot.slane %v1342, 4
      %v1373 = vrot.slane %v1344, 4
      %v1374 = vrot.slane %v1346, 4
      %v1375 = vrot.slane %v1348, 4
      %v1376 = vrot.slane %v1350, 4
      %v1377 = vrot.slane %v1352, 4
      %v1378 = vrot.slane %v1354, 4
      %v1379 = vrot.slane %v1356, 4
      %v1380 = vrot.slane %v1358, 4
      %v1381 = vrot.slane %v1360, 4
      %v1382 = vrot.slane %v1362, 4
      %v1383 = vrot.slane %v1364, 4
      %v1384 = vrot.slane %v1366, 4
      %v1385 = vrot.slane %v1368, 4
      %v1386 = vrot.slane %v1370, 4
      %v1387 = vsel %vm677, %v1371, %v1372
      %vm1388 = vcmask 908288
      %v1389 = vsel %vm1388, %v1340, %v1387
      %v1390 = vsel %vm677, %v1373, %v1374
      %v1391 = vsel %vm1388, %v1344, %v1390
      %v1392 = vsel %vm677, %v1375, %v1376
      %v1393 = vsel %vm1388, %v1348, %v1392
      %v1394 = vsel %vm677, %v1377, %v1378
      %v1395 = vsel %vm1388, %v1352, %v1394
      %v1396 = vsel %vm677, %v1379, %v1380
      %v1397 = vsel %vm1388, %v1356, %v1396
      %v1398 = vsel %vm677, %v1381, %v1382
      %v1399 = vsel %vm1388, %v1360, %v1398
      %v1400 = vsel %vm677, %v1383, %v1384
      %v1401 = vsel %vm1388, %v1364, %v1400
      %v1402 = vsel %vm677, %v1385, %v1386
      %v1403 = vsel %vm1388, %v1368, %v1402
      %1420 = vst [vmem:[#allocation3 + $0x240] sm:$0xff] %v1389
      %1421 = vst.msk [vmem:[#allocation3 + $0x248] sm:$0xf] %vm581, %v1342
      %1422 = vst [vmem:[#allocation3 + $0x24c] sm:$0xff] %v1391
      %1423 = vst.msk [vmem:[#allocation3 + $0x254] sm:$0xf] %vm581, %v1346
      %1424 = vst [vmem:[#allocation3 + $0x258] sm:$0xff] %v1393
      %1425 = vst.msk [vmem:[#allocation3 + $0x260] sm:$0xf] %vm581, %v1350
      %1426 = vst [vmem:[#allocation3 + $0x264] sm:$0xff] %v1395
      %1427 = vst.msk [vmem:[#allocation3 + $0x26c] sm:$0xf] %vm581, %v1354
      %1428 = vst [vmem:[#allocation3 + $0x270] sm:$0xff] %v1397
      %1429 = vst.msk [vmem:[#allocation3 + $0x278] sm:$0xf] %vm581, %v1358
      %1430 = vst [vmem:[#allocation3 + $0x27c] sm:$0xff] %v1399
      %1431 = vst.msk [vmem:[#allocation3 + $0x284] sm:$0xf] %vm581, %v1362
      %1432 = vst [vmem:[#allocation3 + $0x288] sm:$0xff] %v1401
      %1433 = vst.msk [vmem:[#allocation3 + $0x290] sm:$0xf] %vm581, %v1366
      %1434 = vst [vmem:[#allocation3 + $0x294] sm:$0xff] %v1403
      %1435 = vst.msk [vmem:[#allocation3 + $0x29c] sm:$0xf] %vm581, %v1370
      %v1436 = vld [vmem:[#allocation2 + $0x4] sm:$0xff]
      %v1437 = vld [vmem:[#allocation2 + $0xc] sm:$0xf]
      %v1438 = vld [vmem:[#allocation2 + $0x18] sm:$0xff]
      %v1439 = vld [vmem:[#allocation2 + $0x20] sm:$0xf]
      %v1440 = vld [vmem:[#allocation2 + $0x2c] sm:$0xff]
      %v1441 = vld [vmem:[#allocation2 + $0x34] sm:$0xf]
      %v1442 = vld [vmem:[#allocation2 + $0x40] sm:$0xff]
      %v1443 = vld [vmem:[#allocation2 + $0x48] sm:$0xf]
      %v1444 = vld [vmem:[#allocation2 + $0x54] sm:$0xff]
      %v1445 = vld [vmem:[#allocation2 + $0x5c] sm:$0xf]
      %v1446 = vld [vmem:[#allocation2 + $0x68] sm:$0xff]
      %v1447 = vld [vmem:[#allocation2 + $0x70] sm:$0xf]
      %v1448 = vld [vmem:[#allocation2 + $0x7c] sm:$0xff]
      %v1449 = vld [vmem:[#allocation2 + $0x84] sm:$0xf]
      %v1450 = vld [vmem:[#allocation2 + $0x90] sm:$0xff]
      %v1451 = vld [vmem:[#allocation2 + $0x98] sm:$0xf]
      %1468 = vrot.lane.b32.xlu0 %v1436, 110
      %v1469 = vpop.permute.xlu0 %1468
      %1470 = vrot.lane.b32.xlu0 %v1437, 110
      %v1471 = vpop.permute.xlu0 %1470
      %1472 = vrot.lane.b32.xlu0 %v1438, 110
      %v1473 = vpop.permute.xlu0 %1472
      %1474 = vrot.lane.b32.xlu0 %v1439, 110
      %v1475 = vpop.permute.xlu0 %1474
      %1476 = vrot.lane.b32.xlu0 %v1440, 110
      %v1477 = vpop.permute.xlu0 %1476
      %1478 = vrot.lane.b32.xlu0 %v1441, 110
      %v1479 = vpop.permute.xlu0 %1478
      %1480 = vrot.lane.b32.xlu0 %v1442, 110
      %v1481 = vpop.permute.xlu0 %1480
      %1482 = vrot.lane.b32.xlu0 %v1443, 110
      %v1483 = vpop.permute.xlu0 %1482
      %1484 = vrot.lane.b32.xlu0 %v1444, 110
      %v1485 = vpop.permute.xlu0 %1484
      %1486 = vrot.lane.b32.xlu0 %v1445, 110
      %v1487 = vpop.permute.xlu0 %1486
      %1488 = vrot.lane.b32.xlu0 %v1446, 110
      %v1489 = vpop.permute.xlu0 %1488
      %1490 = vrot.lane.b32.xlu0 %v1447, 110
      %v1491 = vpop.permute.xlu0 %1490
      %1492 = vrot.lane.b32.xlu0 %v1448, 110
      %v1493 = vpop.permute.xlu0 %1492
      %1494 = vrot.lane.b32.xlu0 %v1449, 110
      %v1495 = vpop.permute.xlu0 %1494
      %1496 = vrot.lane.b32.xlu0 %v1450, 110
      %v1497 = vpop.permute.xlu0 %1496
      %1498 = vrot.lane.b32.xlu0 %v1451, 110
      %v1499 = vpop.permute.xlu0 %1498
      %v1500 = vrot.slane %v1469, 4
      %v1501 = vrot.slane %v1471, 4
      %v1502 = vrot.slane %v1473, 4
      %v1503 = vrot.slane %v1475, 4
      %v1504 = vrot.slane %v1477, 4
      %v1505 = vrot.slane %v1479, 4
      %v1506 = vrot.slane %v1481, 4
      %v1507 = vrot.slane %v1483, 4
      %v1508 = vrot.slane %v1485, 4
      %v1509 = vrot.slane %v1487, 4
      %v1510 = vrot.slane %v1489, 4
      %v1511 = vrot.slane %v1491, 4
      %v1512 = vrot.slane %v1493, 4
      %v1513 = vrot.slane %v1495, 4
      %v1514 = vrot.slane %v1497, 4
      %v1515 = vrot.slane %v1499, 4
      %v1516 = vsel %vm677, %v1500, %v1501
      %vm1517 = vcmask 900096
      %v1518 = vsel %vm1517, %v1469, %v1516
      %v1519 = vsel %vm677, %v1502, %v1503
      %v1520 = vsel %vm1517, %v1473, %v1519
      %v1521 = vsel %vm677, %v1504, %v1505
      %v1522 = vsel %vm1517, %v1477, %v1521
      %v1523 = vsel %vm677, %v1506, %v1507
      %v1524 = vsel %vm1517, %v1481, %v1523
      %v1525 = vsel %vm677, %v1508, %v1509
      %v1526 = vsel %vm1517, %v1485, %v1525
      %v1527 = vsel %vm677, %v1510, %v1511
      %v1528 = vsel %vm1517, %v1489, %v1527
      %v1529 = vsel %vm677, %v1512, %v1513
      %v1530 = vsel %vm1517, %v1493, %v1529
      %v1531 = vsel %vm677, %v1514, %v1515
      %v1532 = vsel %vm1517, %v1497, %v1531
      %1549 = vst [vmem:[#allocation3 + $0x2a0] sm:$0xff] %v1518
      %1550 = vst.msk [vmem:[#allocation3 + $0x2a8] sm:$0xf] %vm581, %v1471
      %1551 = vst [vmem:[#allocation3 + $0x2ac] sm:$0xff] %v1520
      %1552 = vst.msk [vmem:[#allocation3 + $0x2b4] sm:$0xf] %vm581, %v1475
      %1553 = vst [vmem:[#allocation3 + $0x2b8] sm:$0xff] %v1522
      %1554 = vst.msk [vmem:[#allocation3 + $0x2c0] sm:$0xf] %vm581, %v1479
      %1555 = vst [vmem:[#allocation3 + $0x2c4] sm:$0xff] %v1524
      %1556 = vst.msk [vmem:[#allocation3 + $0x2cc] sm:$0xf] %vm581, %v1483
      %1557 = vst [vmem:[#allocation3 + $0x2d0] sm:$0xff] %v1526
      %1558 = vst.msk [vmem:[#allocation3 + $0x2d8] sm:$0xf] %vm581, %v1487
      %1559 = vst [vmem:[#allocation3 + $0x2dc] sm:$0xff] %v1528
      %1560 = vst.msk [vmem:[#allocation3 + $0x2e4] sm:$0xf] %vm581, %v1491
      %1561 = vst [vmem:[#allocation3 + $0x2e8] sm:$0xff] %v1530
      %1562 = vst.msk [vmem:[#allocation3 + $0x2f0] sm:$0xf] %vm581, %v1495
      %1563 = vst [vmem:[#allocation3 + $0x2f4] sm:$0xff] %v1532
      %1564 = vst.msk [vmem:[#allocation3 + $0x2fc] sm:$0xf] %vm581, %v1499
      %v1565 = vld [vmem:[#allocation2 + $0x4] sm:$0xff]
      %v1566 = vld [vmem:[#allocation2 + $0xc] sm:$0xf]
      %v1567 = vld [vmem:[#allocation2 + $0x18] sm:$0xff]
      %v1568 = vld [vmem:[#allocation2 + $0x20] sm:$0xf]
      %v1569 = vld [vmem:[#allocation2 + $0x2c] sm:$0xff]
      %v1570 = vld [vmem:[#allocation2 + $0x34] sm:$0xf]
      %v1571 = vld [vmem:[#allocation2 + $0x40] sm:$0xff]
      %v1572 = vld [vmem:[#allocation2 + $0x48] sm:$0xf]
      %v1573 = vld [vmem:[#allocation2 + $0x54] sm:$0xff]
      %v1574 = vld [vmem:[#allocation2 + $0x5c] sm:$0xf]
      %v1575 = vld [vmem:[#allocation2 + $0x68] sm:$0xff]
      %v1576 = vld [vmem:[#allocation2 + $0x70] sm:$0xf]
      %v1577 = vld [vmem:[#allocation2 + $0x7c] sm:$0xff]
      %v1578 = vld [vmem:[#allocation2 + $0x84] sm:$0xf]
      %v1579 = vld [vmem:[#allocation2 + $0x90] sm:$0xff]
      %v1580 = vld [vmem:[#allocation2 + $0x98] sm:$0xf]
      %1597 = vrot.lane.b32.xlu0 %v1565, 109
      %v1598 = vpop.permute.xlu0 %1597
      %1599 = vrot.lane.b32.xlu0 %v1566, 109
      %v1600 = vpop.permute.xlu0 %1599
      %1601 = vrot.lane.b32.xlu0 %v1567, 109
      %v1602 = vpop.permute.xlu0 %1601
      %1603 = vrot.lane.b32.xlu0 %v1568, 109
      %v1604 = vpop.permute.xlu0 %1603
      %1605 = vrot.lane.b32.xlu0 %v1569, 109
      %v1606 = vpop.permute.xlu0 %1605
      %1607 = vrot.lane.b32.xlu0 %v1570, 109
      %v1608 = vpop.permute.xlu0 %1607
      %1609 = vrot.lane.b32.xlu0 %v1571, 109
      %v1610 = vpop.permute.xlu0 %1609
      %1611 = vrot.lane.b32.xlu0 %v1572, 109
      %v1612 = vpop.permute.xlu0 %1611
      %1613 = vrot.lane.b32.xlu0 %v1573, 109
      %v1614 = vpop.permute.xlu0 %1613
      %1615 = vrot.lane.b32.xlu0 %v1574, 109
      %v1616 = vpop.permute.xlu0 %1615
      %1617 = vrot.lane.b32.xlu0 %v1575, 109
      %v1618 = vpop.permute.xlu0 %1617
      %1619 = vrot.lane.b32.xlu0 %v1576, 109
      %v1620 = vpop.permute.xlu0 %1619
      %1621 = vrot.lane.b32.xlu0 %v1577, 109
      %v1622 = vpop.permute.xlu0 %1621
      %1623 = vrot.lane.b32.xlu0 %v1578, 109
      %v1624 = vpop.permute.xlu0 %1623
      %1625 = vrot.lane.b32.xlu0 %v1579, 109
      %v1626 = vpop.permute.xlu0 %1625
      %1627 = vrot.lane.b32.xlu0 %v1580, 109
      %v1628 = vpop.permute.xlu0 %1627
      %v1629 = vrot.slane %v1598, 4
      %v1630 = vrot.slane %v1600, 4
      %v1631 = vrot.slane %v1602, 4
      %v1632 = vrot.slane %v1604, 4
      %v1633 = vrot.slane %v1606, 4
      %v1634 = vrot.slane %v1608, 4
      %v1635 = vrot.slane %v1610, 4
      %v1636 = vrot.slane %v1612, 4
      %v1637 = vrot.slane %v1614, 4
      %v1638 = vrot.slane %v1616, 4
      %v1639 = vrot.slane %v1618, 4
      %v1640 = vrot.slane %v1620, 4
      %v1641 = vrot.slane %v1622, 4
      %v1642 = vrot.slane %v1624, 4
      %v1643 = vrot.slane %v1626, 4
      %v1644 = vrot.slane %v1628, 4
      %v1645 = vsel %vm677, %v1629, %v1630
      %vm1646 = vcmask 891904
      %v1647 = vsel %vm1646, %v1598, %v1645
      %v1648 = vsel %vm677, %v1631, %v1632
      %v1649 = vsel %vm1646, %v1602, %v1648
      %v1650 = vsel %vm677, %v1633, %v1634
      %v1651 = vsel %vm1646, %v1606, %v1650
      %v1652 = vsel %vm677, %v1635, %v1636
      %v1653 = vsel %vm1646, %v1610, %v1652
      %v1654 = vsel %vm677, %v1637, %v1638
      %v1655 = vsel %vm1646, %v1614, %v1654
      %v1656 = vsel %vm677, %v1639, %v1640
      %v1657 = vsel %vm1646, %v1618, %v1656
      %v1658 = vsel %vm677, %v1641, %v1642
      %v1659 = vsel %vm1646, %v1622, %v1658
      %v1660 = vsel %vm677, %v1643, %v1644
      %v1661 = vsel %vm1646, %v1626, %v1660
      %1678 = vst [vmem:[#allocation3 + $0x300] sm:$0xff] %v1647
      %1679 = vst.msk [vmem:[#allocation3 + $0x308] sm:$0xf] %vm581, %v1600
      %1680 = vst [vmem:[#allocation3 + $0x30c] sm:$0xff] %v1649
      %1681 = vst.msk [vmem:[#allocation3 + $0x314] sm:$0xf] %vm581, %v1604
      %1682 = vst [vmem:[#allocation3 + $0x318] sm:$0xff] %v1651
      %1683 = vst.msk [vmem:[#allocation3 + $0x320] sm:$0xf] %vm581, %v1608
      %1684 = vst [vmem:[#allocation3 + $0x324] sm:$0xff] %v1653
      %1685 = vst.msk [vmem:[#allocation3 + $0x32c] sm:$0xf] %vm581, %v1612
      %1686 = vst [vmem:[#allocation3 + $0x330] sm:$0xff] %v1655
      %1687 = vst.msk [vmem:[#allocation3 + $0x338] sm:$0xf] %vm581, %v1616
      %1688 = vst [vmem:[#allocation3 + $0x33c] sm:$0xff] %v1657
      %1689 = vst.msk [vmem:[#allocation3 + $0x344] sm:$0xf] %vm581, %v1620
      %1690 = vst [vmem:[#allocation3 + $0x348] sm:$0xff] %v1659
      %1691 = vst.msk [vmem:[#allocation3 + $0x350] sm:$0xf] %vm581, %v1624
      %1692 = vst [vmem:[#allocation3 + $0x354] sm:$0xff] %v1661
      %1693 = vst.msk [vmem:[#allocation3 + $0x35c] sm:$0xf] %vm581, %v1628
      %v1694 = vld [vmem:[%s3] sm:$0xff]
      %v1695 = vld [vmem:[%s3 + $0x8] sm:$0x3]
      %v1696 = vld [vmem:[#allocation3] sm:$0xff]
      %v1697 = vld [vmem:[#allocation3 + $0x8] sm:$0xf]
      %v1698 = vld [vmem:[#allocation3 + $0xc] sm:$0xff]
      %v1699 = vld [vmem:[#allocation3 + $0x14] sm:$0xf]
      %v1700 = vld [vmem:[#allocation3 + $0x18] sm:$0xff]
      %v1701 = vld [vmem:[#allocation3 + $0x20] sm:$0xf]
      %v1702 = vld [vmem:[#allocation3 + $0x24] sm:$0xff]
      %v1703 = vld [vmem:[#allocation3 + $0x2c] sm:$0xf]
      %v1704 = vld [vmem:[#allocation3 + $0x30] sm:$0xff]
      %v1705 = vld [vmem:[#allocation3 + $0x38] sm:$0xf]
      %v1706 = vld [vmem:[#allocation3 + $0x3c] sm:$0xff]
      %v1707 = vld [vmem:[#allocation3 + $0x44] sm:$0xf]
      %v1708 = vld [vmem:[#allocation3 + $0x48] sm:$0xff]
      %v1709 = vld [vmem:[#allocation3 + $0x50] sm:$0xf]
      %v1710 = vld [vmem:[#allocation3 + $0x54] sm:$0xff]
      %v1711 = vld [vmem:[#allocation3 + $0x5c] sm:$0xf]
      %v1712 = vld [vmem:[#allocation3 + $0x60] sm:$0xff]
      %v1713 = vld [vmem:[#allocation3 + $0x68] sm:$0xf]
      %v1714 = vld [vmem:[#allocation3 + $0x6c] sm:$0xff]
      %v1715 = vld [vmem:[#allocation3 + $0x74] sm:$0xf]
      %v1716 = vld [vmem:[#allocation3 + $0x78] sm:$0xff]
      %v1717 = vld [vmem:[#allocation3 + $0x80] sm:$0xf]
      %v1718 = vld [vmem:[#allocation3 + $0x84] sm:$0xff]
      %v1719 = vld [vmem:[#allocation3 + $0x8c] sm:$0xf]
      %v1720 = vld [vmem:[#allocation3 + $0x90] sm:$0xff]
      %v1721 = vld [vmem:[#allocation3 + $0x98] sm:$0xf]
      %v1722 = vld [vmem:[#allocation3 + $0x9c] sm:$0xff]
      %v1723 = vld [vmem:[#allocation3 + $0xa4] sm:$0xf]
      %v1724 = vld [vmem:[#allocation3 + $0xa8] sm:$0xff]
      %v1725 = vld [vmem:[#allocation3 + $0xb0] sm:$0xf]
      %v1726 = vld [vmem:[#allocation3 + $0xb4] sm:$0xff]
      %v1727 = vld [vmem:[#allocation3 + $0xbc] sm:$0xf]
      %v1728 = vld [vmem:[#allocation3 + $0xc0] sm:$0xff]
      %v1729 = vld [vmem:[#allocation3 + $0xc8] sm:$0xf]
      %v1730 = vld [vmem:[#allocation3 + $0xcc] sm:$0xff]
      %v1731 = vld [vmem:[#allocation3 + $0xd4] sm:$0xf]
      %v1732 = vld [vmem:[#allocation3 + $0xd8] sm:$0xff]
      %v1733 = vld [vmem:[#allocation3 + $0xe0] sm:$0xf]
      %v1734 = vld [vmem:[#allocation3 + $0xe4] sm:$0xff]
      %v1735 = vld [vmem:[#allocation3 + $0xec] sm:$0xf]
      %v1736 = vld [vmem:[#allocation3 + $0xf0] sm:$0xff]
      %v1737 = vld [vmem:[#allocation3 + $0xf8] sm:$0xf]
      %v1738 = vld [vmem:[#allocation3 + $0xfc] sm:$0xff]
      %v1739 = vld [vmem:[#allocation3 + $0x104] sm:$0xf]
      %v1740 = vld [vmem:[#allocation3 + $0x108] sm:$0xff]
      %v1741 = vld [vmem:[#allocation3 + $0x110] sm:$0xf]
      %v1742 = vld [vmem:[#allocation3 + $0x114] sm:$0xff]
      %v1743 = vld [vmem:[#allocation3 + $0x11c] sm:$0xf]
      %v1744 = vld [vmem:[#allocation3 + $0x120] sm:$0xff]
      %v1745 = vld [vmem:[#allocation3 + $0x128] sm:$0xf]
      %v1746 = vld [vmem:[#allocation3 + $0x12c] sm:$0xff]
      %v1747 = vld [vmem:[#allocation3 + $0x134] sm:$0xf]
      %v1748 = vld [vmem:[#allocation3 + $0x138] sm:$0xff]
      %v1749 = vld [vmem:[#allocation3 + $0x140] sm:$0xf]
      %v1750 = vld [vmem:[#allocation3 + $0x144] sm:$0xff]
      %v1751 = vld [vmem:[#allocation3 + $0x14c] sm:$0xf]
      %v1752 = vld [vmem:[#allocation3 + $0x150] sm:$0xff]
      %v1753 = vld [vmem:[#allocation3 + $0x158] sm:$0xf]
      %v1754 = vld [vmem:[#allocation3 + $0x15c] sm:$0xff]
      %v1755 = vld [vmem:[#allocation3 + $0x164] sm:$0xf]
      %v1756 = vld [vmem:[#allocation3 + $0x168] sm:$0xff]
      %v1757 = vld [vmem:[#allocation3 + $0x170] sm:$0xf]
      %v1758 = vld [vmem:[#allocation3 + $0x174] sm:$0xff]
      %v1759 = vld [vmem:[#allocation3 + $0x17c] sm:$0xf]
      %v1760 = vld [vmem:[#allocation3 + $0x180] sm:$0xff]
      %v1761 = vld [vmem:[#allocation3 + $0x188] sm:$0xf]
      %v1762 = vld [vmem:[#allocation3 + $0x18c] sm:$0xff]
      %v1763 = vld [vmem:[#allocation3 + $0x194] sm:$0xf]
      %v1764 = vld [vmem:[#allocation3 + $0x198] sm:$0xff]
      %v1765 = vld [vmem:[#allocation3 + $0x1a0] sm:$0xf]
      %v1766 = vld [vmem:[#allocation3 + $0x1a4] sm:$0xff]
      %v1767 = vld [vmem:[#allocation3 + $0x1ac] sm:$0xf]
      %v1768 = vld [vmem:[#allocation3 + $0x1b0] sm:$0xff]
      %v1769 = vld [vmem:[#allocation3 + $0x1b8] sm:$0xf]
      %v1770 = vld [vmem:[#allocation3 + $0x1bc] sm:$0xff]
      %v1771 = vld [vmem:[#allocation3 + $0x1c4] sm:$0xf]
      %v1772 = vld [vmem:[#allocation3 + $0x1c8] sm:$0xff]
      %v1773 = vld [vmem:[#allocation3 + $0x1d0] sm:$0xf]
      %v1774 = vld [vmem:[#allocation3 + $0x1d4] sm:$0xff]
      %v1775 = vld [vmem:[#allocation3 + $0x1dc] sm:$0xf]
      %v1776 = vld [vmem:[#allocation3 + $0x1e0] sm:$0xff]
      %v1777 = vld [vmem:[#allocation3 + $0x1e8] sm:$0xf]
      %v1778 = vld [vmem:[#allocation3 + $0x1ec] sm:$0xff]
      %v1779 = vld [vmem:[#allocation3 + $0x1f4] sm:$0xf]
      %v1780 = vld [vmem:[#allocation3 + $0x1f8] sm:$0xff]
      %v1781 = vld [vmem:[#allocation3 + $0x200] sm:$0xf]
      %v1782 = vld [vmem:[#allocation3 + $0x204] sm:$0xff]
      %v1783 = vld [vmem:[#allocation3 + $0x20c] sm:$0xf]
      %v1784 = vld [vmem:[#allocation3 + $0x210] sm:$0xff]
      %v1785 = vld [vmem:[#allocation3 + $0x218] sm:$0xf]
      %v1786 = vld [vmem:[#allocation3 + $0x21c] sm:$0xff]
      %v1787 = vld [vmem:[#allocation3 + $0x224] sm:$0xf]
      %v1788 = vld [vmem:[#allocation3 + $0x228] sm:$0xff]
      %v1789 = vld [vmem:[#allocation3 + $0x230] sm:$0xf]
      %v1790 = vld [vmem:[#allocation3 + $0x234] sm:$0xff]
      %v1791 = vld [vmem:[#allocation3 + $0x23c] sm:$0xf]
      %v1792 = vld [vmem:[#allocation3 + $0x240] sm:$0xff]
      %v1793 = vld [vmem:[#allocation3 + $0x248] sm:$0xf]
      %v1794 = vld [vmem:[#allocation3 + $0x24c] sm:$0xff]
      %v1795 = vld [vmem:[#allocation3 + $0x254] sm:$0xf]
      %v1796 = vld [vmem:[#allocation3 + $0x258] sm:$0xff]
      %v1797 = vld [vmem:[#allocation3 + $0x260] sm:$0xf]
      %v1798 = vld [vmem:[#allocation3 + $0x264] sm:$0xff]
      %v1799 = vld [vmem:[#allocation3 + $0x26c] sm:$0xf]
      %v1800 = vld [vmem:[#allocation3 + $0x270] sm:$0xff]
      %v1801 = vld [vmem:[#allocation3 + $0x278] sm:$0xf]
      %v1802 = vld [vmem:[#allocation3 + $0x27c] sm:$0xff]
      %v1803 = vld [vmem:[#allocation3 + $0x284] sm:$0xf]
      %v1804 = vld [vmem:[#allocation3 + $0x288] sm:$0xff]
      %v1805 = vld [vmem:[#allocation3 + $0x290] sm:$0xf]
      %v1806 = vld [vmem:[#allocation3 + $0x294] sm:$0xff]
      %v1807 = vld [vmem:[#allocation3 + $0x29c] sm:$0xf]
      %v1808 = vld [vmem:[#allocation3 + $0x2a0] sm:$0xff]
      %v1809 = vld [vmem:[#allocation3 + $0x2a8] sm:$0xf]
      %v1810 = vld [vmem:[#allocation3 + $0x2ac] sm:$0xff]
      %v1811 = vld [vmem:[#allocation3 + $0x2b4] sm:$0xf]
      %v1812 = vld [vmem:[#allocation3 + $0x2b8] sm:$0xff]
      %v1813 = vld [vmem:[#allocation3 + $0x2c0] sm:$0xf]
      %v1814 = vld [vmem:[#allocation3 + $0x2c4] sm:$0xff]
      %v1815 = vld [vmem:[#allocation3 + $0x2cc] sm:$0xf]
      %v1816 = vld [vmem:[#allocation3 + $0x2d0] sm:$0xff]
      %v1817 = vld [vmem:[#allocation3 + $0x2d8] sm:$0xf]
      %v1818 = vld [vmem:[#allocation3 + $0x2dc] sm:$0xff]
      %v1819 = vld [vmem:[#allocation3 + $0x2e4] sm:$0xf]
      %v1820 = vld [vmem:[#allocation3 + $0x2e8] sm:$0xff]
      %v1821 = vld [vmem:[#allocation3 + $0x2f0] sm:$0xf]
      %v1822 = vld [vmem:[#allocation3 + $0x2f4] sm:$0xff]
      %v1823 = vld [vmem:[#allocation3 + $0x2fc] sm:$0xf]
      %v1824 = vld [vmem:[#allocation3 + $0x300] sm:$0xff]
      %v1825 = vld [vmem:[#allocation3 + $0x308] sm:$0xf]
      %v1826 = vld [vmem:[#allocation3 + $0x30c] sm:$0xff]
      %v1827 = vld [vmem:[#allocation3 + $0x314] sm:$0xf]
      %v1828 = vld [vmem:[#allocation3 + $0x318] sm:$0xff]
      %v1829 = vld [vmem:[#allocation3 + $0x320] sm:$0xf]
      %v1830 = vld [vmem:[#allocation3 + $0x324] sm:$0xff]
      %v1831 = vld [vmem:[#allocation3 + $0x32c] sm:$0xf]
      %v1832 = vld [vmem:[#allocation3 + $0x330] sm:$0xff]
      %v1833 = vld [vmem:[#allocation3 + $0x338] sm:$0xf]
      %v1834 = vld [vmem:[#allocation3 + $0x33c] sm:$0xff]
      %v1835 = vld [vmem:[#allocation3 + $0x344] sm:$0xf]
      %v1836 = vld [vmem:[#allocation3 + $0x348] sm:$0xff]
      %v1837 = vld [vmem:[#allocation3 + $0x350] sm:$0xf]
      %v1838 = vld [vmem:[#allocation3 + $0x354] sm:$0xff]
      %v1839 = vld [vmem:[#allocation3 + $0x35c] sm:$0xf]
      %v1840 = vld [vmem:[%s4] sm:$0x7]
      %1842 = vset.pattern.permute.xlu0 0
      %1843 = vperm.xlu0 %1842, %v1840
      %v1844 = vpop.permute.xlu0 %1843
      %1847 = vst [vmem:[#allocation1] ss:$4 sm:$0xff] %v1694
      %s1849 = scalar_lea.vmem [#allocation1], 32
      %1850 = vst [vmem:[%s1849] ss:$4 sm:$0xff] %v1695
      %v1851 = vld.sshfl [vmem:[#allocation1] sm:$0xff pattern:$0x73625140]
      %v1852 = vld.sshfl [vmem:[#allocation1 + $0x8] sm:$0xff pattern:$0x73625140]
      %v1853 = vld.sshfl [vmem:[#allocation1 + $0x10] sm:$0xff pattern:$0x73625140]
      %v1854 = vld.sshfl [vmem:[#allocation1 + $0x18] sm:$0xff pattern:$0x73625140]
      %v1855 = vld.sshfl [vmem:[#allocation1 + $0x20] sm:$0xff pattern:$0x73625140]
      %v2004 = vunpack.c.l.b16 %v1696
      %v2005 = vunpack.c.h.b16 %v1696
      %v2006 = vunpack.c.l.b16 %v1697
      %v2007 = vunpack.c.l.b16 %v1698
      %v2008 = vunpack.c.h.b16 %v1698
      %v2009 = vunpack.c.l.b16 %v1699
      %v2010 = vunpack.c.l.b16 %v1700
      %v2011 = vunpack.c.h.b16 %v1700
      %v2012 = vunpack.c.l.b16 %v1701
      %v2013 = vunpack.c.l.b16 %v1702
      %v2014 = vunpack.c.h.b16 %v1702
      %v2015 = vunpack.c.l.b16 %v1703
      %v2016 = vunpack.c.l.b16 %v1704
      %v2017 = vunpack.c.h.b16 %v1704
      %v2018 = vunpack.c.l.b16 %v1705
      %v2019 = vunpack.c.l.b16 %v1706
      %v2020 = vunpack.c.h.b16 %v1706
      %v2021 = vunpack.c.l.b16 %v1707
      %v2022 = vunpack.c.l.b16 %v1708
      %v2023 = vunpack.c.h.b16 %v1708
      %v2024 = vunpack.c.l.b16 %v1709
      %v2025 = vunpack.c.l.b16 %v1710
      %v2026 = vunpack.c.h.b16 %v1710
      %v2027 = vunpack.c.l.b16 %v1711
      %v2028 = vunpack.c.l.b16 %v1712
      %v2029 = vunpack.c.h.b16 %v1712
      %v2030 = vunpack.c.l.b16 %v1713
      %v2031 = vunpack.c.l.b16 %v1714
      %v2032 = vunpack.c.h.b16 %v1714
      %v2033 = vunpack.c.l.b16 %v1715
      %v2034 = vunpack.c.l.b16 %v1716
      %v2035 = vunpack.c.h.b16 %v1716
      %v2036 = vunpack.c.l.b16 %v1717
      %v2037 = vunpack.c.l.b16 %v1718
      %v2038 = vunpack.c.h.b16 %v1718
      %v2039 = vunpack.c.l.b16 %v1719
      %v2040 = vunpack.c.l.b16 %v1720
      %v2041 = vunpack.c.h.b16 %v1720
      %v2042 = vunpack.c.l.b16 %v1721
      %v2043 = vunpack.c.l.b16 %v1722
      %v2044 = vunpack.c.h.b16 %v1722
      %v2045 = vunpack.c.l.b16 %v1723
      %v2046 = vunpack.c.l.b16 %v1724
      %v2047 = vunpack.c.h.b16 %v1724
      %v2048 = vunpack.c.l.b16 %v1725
      %v2049 = vunpack.c.l.b16 %v1726
      %v2050 = vunpack.c.h.b16 %v1726
      %v2051 = vunpack.c.l.b16 %v1727
      %v2052 = vunpack.c.l.b16 %v1728
      %v2053 = vunpack.c.h.b16 %v1728
      %v2054 = vunpack.c.l.b16 %v1729
      %v2055 = vunpack.c.l.b16 %v1730
      %v2056 = vunpack.c.h.b16 %v1730
      %v2057 = vunpack.c.l.b16 %v1731
      %v2058 = vunpack.c.l.b16 %v1732
      %v2059 = vunpack.c.h.b16 %v1732
      %v2060 = vunpack.c.l.b16 %v1733
      %v2061 = vunpack.c.l.b16 %v1734
      %v2062 = vunpack.c.h.b16 %v1734
      %v2063 = vunpack.c.l.b16 %v1735
      %v2064 = vunpack.c.l.b16 %v1736
      %v2065 = vunpack.c.h.b16 %v1736
      %v2066 = vunpack.c.l.b16 %v1737
      %v2067 = vunpack.c.l.b16 %v1738
      %v2068 = vunpack.c.h.b16 %v1738
      %v2069 = vunpack.c.l.b16 %v1739
      %v2070 = vunpack.c.l.b16 %v1740
      %v2071 = vunpack.c.h.b16 %v1740
      %v2072 = vunpack.c.l.b16 %v1741
      %v2073 = vunpack.c.l.b16 %v1742
      %v2074 = vunpack.c.h.b16 %v1742
      %v2075 = vunpack.c.l.b16 %v1743
      %v2076 = vunpack.c.l.b16 %v1744
      %v2077 = vunpack.c.h.b16 %v1744
      %v2078 = vunpack.c.l.b16 %v1745
      %v2079 = vunpack.c.l.b16 %v1746
      %v2080 = vunpack.c.h.b16 %v1746
      %v2081 = vunpack.c.l.b16 %v1747
      %v2082 = vunpack.c.l.b16 %v1748
      %v2083 = vunpack.c.h.b16 %v1748
      %v2084 = vunpack.c.l.b16 %v1749
      %v2085 = vunpack.c.l.b16 %v1750
      %v2086 = vunpack.c.h.b16 %v1750
      %v2087 = vunpack.c.l.b16 %v1751
      %v2088 = vunpack.c.l.b16 %v1752
      %v2089 = vunpack.c.h.b16 %v1752
      %v2090 = vunpack.c.l.b16 %v1753
      %v2091 = vunpack.c.l.b16 %v1754
      %v2092 = vunpack.c.h.b16 %v1754
      %v2093 = vunpack.c.l.b16 %v1755
      %v2094 = vunpack.c.l.b16 %v1756
      %v2095 = vunpack.c.h.b16 %v1756
      %v2096 = vunpack.c.l.b16 %v1757
      %v2097 = vunpack.c.l.b16 %v1758
      %v2098 = vunpack.c.h.b16 %v1758
      %v2099 = vunpack.c.l.b16 %v1759
      %v2100 = vunpack.c.l.b16 %v1760
      %v2101 = vunpack.c.h.b16 %v1760
      %v2102 = vunpack.c.l.b16 %v1761
      %v2103 = vunpack.c.l.b16 %v1762
      %v2104 = vunpack.c.h.b16 %v1762
      %v2105 = vunpack.c.l.b16 %v1763
      %v2106 = vunpack.c.l.b16 %v1764
      %v2107 = vunpack.c.h.b16 %v1764
      %v2108 = vunpack.c.l.b16 %v1765
      %v2109 = vunpack.c.l.b16 %v1766
      %v2110 = vunpack.c.h.b16 %v1766
      %v2111 = vunpack.c.l.b16 %v1767
      %v2112 = vunpack.c.l.b16 %v1768
      %v2113 = vunpack.c.h.b16 %v1768
      %v2114 = vunpack.c.l.b16 %v1769
      %v2115 = vunpack.c.l.b16 %v1770
      %v2116 = vunpack.c.h.b16 %v1770
      %v2117 = vunpack.c.l.b16 %v1771
      %v2118 = vunpack.c.l.b16 %v1772
      %v2119 = vunpack.c.h.b16 %v1772
      %v2120 = vunpack.c.l.b16 %v1773
      %v2121 = vunpack.c.l.b16 %v1774
      %v2122 = vunpack.c.h.b16 %v1774
      %v2123 = vunpack.c.l.b16 %v1775
      %v2124 = vunpack.c.l.b16 %v1776
      %v2125 = vunpack.c.h.b16 %v1776
      %v2126 = vunpack.c.l.b16 %v1777
      %v2127 = vunpack.c.l.b16 %v1778
      %v2128 = vunpack.c.h.b16 %v1778
      %v2129 = vunpack.c.l.b16 %v1779
      %v2130 = vunpack.c.l.b16 %v1780
      %v2131 = vunpack.c.h.b16 %v1780
      %v2132 = vunpack.c.l.b16 %v1781
      %v2133 = vunpack.c.l.b16 %v1782
      %v2134 = vunpack.c.h.b16 %v1782
      %v2135 = vunpack.c.l.b16 %v1783
      %v2136 = vunpack.c.l.b16 %v1784
      %v2137 = vunpack.c.h.b16 %v1784
      %v2138 = vunpack.c.l.b16 %v1785
      %v2139 = vunpack.c.l.b16 %v1786
      %v2140 = vunpack.c.h.b16 %v1786
      %v2141 = vunpack.c.l.b16 %v1787
      %v2142 = vunpack.c.l.b16 %v1788
      %v2143 = vunpack.c.h.b16 %v1788
      %v2144 = vunpack.c.l.b16 %v1789
      %v2145 = vunpack.c.l.b16 %v1790
      %v2146 = vunpack.c.h.b16 %v1790
      %v2147 = vunpack.c.l.b16 %v1791
      %v2148 = vunpack.c.l.b16 %v1792
      %v2149 = vunpack.c.h.b16 %v1792
      %v2150 = vunpack.c.l.b16 %v1793
      %v2151 = vunpack.c.l.b16 %v1794
      %v2152 = vunpack.c.h.b16 %v1794
      %v2153 = vunpack.c.l.b16 %v1795
      %v2154 = vunpack.c.l.b16 %v1796
      %v2155 = vunpack.c.h.b16 %v1796
      %v2156 = vunpack.c.l.b16 %v1797
      %v2157 = vunpack.c.l.b16 %v1798
      %v2158 = vunpack.c.h.b16 %v1798
      %v2159 = vunpack.c.l.b16 %v1799
      %v2160 = vunpack.c.l.b16 %v1800
      %v2161 = vunpack.c.h.b16 %v1800
      %v2162 = vunpack.c.l.b16 %v1801
      %v2163 = vunpack.c.l.b16 %v1802
      %v2164 = vunpack.c.h.b16 %v1802
      %v2165 = vunpack.c.l.b16 %v1803
      %v2166 = vunpack.c.l.b16 %v1804
      %v2167 = vunpack.c.h.b16 %v1804
      %v2168 = vunpack.c.l.b16 %v1805
      %v2169 = vunpack.c.l.b16 %v1806
      %v2170 = vunpack.c.h.b16 %v1806
      %v2171 = vunpack.c.l.b16 %v1807
      %v2172 = vunpack.c.l.b16 %v1808
      %v2173 = vunpack.c.h.b16 %v1808
      %v2174 = vunpack.c.l.b16 %v1809
      %v2175 = vunpack.c.l.b16 %v1810
      %v2176 = vunpack.c.h.b16 %v1810
      %v2177 = vunpack.c.l.b16 %v1811
      %v2178 = vunpack.c.l.b16 %v1812
      %v2179 = vunpack.c.h.b16 %v1812
      %v2180 = vunpack.c.l.b16 %v1813
      %v2181 = vunpack.c.l.b16 %v1814
      %v2182 = vunpack.c.h.b16 %v1814
      %v2183 = vunpack.c.l.b16 %v1815
      %v2184 = vunpack.c.l.b16 %v1816
      %v2185 = vunpack.c.h.b16 %v1816
      %v2186 = vunpack.c.l.b16 %v1817
      %v2187 = vunpack.c.l.b16 %v1818
      %v2188 = vunpack.c.h.b16 %v1818
      %v2189 = vunpack.c.l.b16 %v1819
      %v2190 = vunpack.c.l.b16 %v1820
      %v2191 = vunpack.c.h.b16 %v1820
      %v2192 = vunpack.c.l.b16 %v1821
      %v2193 = vunpack.c.l.b16 %v1822
      %v2194 = vunpack.c.h.b16 %v1822
      %v2195 = vunpack.c.l.b16 %v1823
      %v2196 = vunpack.c.l.b16 %v1824
      %v2197 = vunpack.c.h.b16 %v1824
      %v2198 = vunpack.c.l.b16 %v1825
      %v2199 = vunpack.c.l.b16 %v1826
      %v2200 = vunpack.c.h.b16 %v1826
      %v2201 = vunpack.c.l.b16 %v1827
      %v2202 = vunpack.c.l.b16 %v1828
      %v2203 = vunpack.c.h.b16 %v1828
      %v2204 = vunpack.c.l.b16 %v1829
      %v2205 = vunpack.c.l.b16 %v1830
      %v2206 = vunpack.c.h.b16 %v1830
      %v2207 = vunpack.c.l.b16 %v1831
      %v2208 = vunpack.c.l.b16 %v1832
      %v2209 = vunpack.c.h.b16 %v1832
      %v2210 = vunpack.c.l.b16 %v1833
      %v2211 = vunpack.c.l.b16 %v1834
      %v2212 = vunpack.c.h.b16 %v1834
      %v2213 = vunpack.c.l.b16 %v1835
      %v2214 = vunpack.c.l.b16 %v1836
      %v2215 = vunpack.c.h.b16 %v1836
      %v2216 = vunpack.c.l.b16 %v1837
      %v2217 = vunpack.c.l.b16 %v1838
      %v2218 = vunpack.c.h.b16 %v1838
      %v2219 = vunpack.c.l.b16 %v1839
      %v2220 = vpack.c.b16 %v2007, %v2004
      %v2221 = vpack.c.b16 %v2008, %v2005
      %v2222 = vpack.c.b16 %v2009, %v2006
      %v2223 = vpack.c.b16 %v2013, %v2010
      %v2224 = vpack.c.b16 %v2014, %v2011
      %v2225 = vpack.c.b16 %v2015, %v2012
      %v2226 = vpack.c.b16 %v2019, %v2016
      %v2227 = vpack.c.b16 %v2020, %v2017
      %v2228 = vpack.c.b16 %v2021, %v2018
      %v2229 = vpack.c.b16 %v2025, %v2022
      %v2230 = vpack.c.b16 %v2026, %v2023
      %v2231 = vpack.c.b16 %v2027, %v2024
      %v2232 = vpack.c.b16 %v2031, %v2028
      %v2233 = vpack.c.b16 %v2032, %v2029
      %v2234 = vpack.c.b16 %v2033, %v2030
      %v2235 = vpack.c.b16 %v2037, %v2034
      %v2236 = vpack.c.b16 %v2038, %v2035
      %v2237 = vpack.c.b16 %v2039, %v2036
      %v2238 = vpack.c.b16 %v2043, %v2040
      %v2239 = vpack.c.b16 %v2044, %v2041
      %v2240 = vpack.c.b16 %v2045, %v2042
      %v2241 = vpack.c.b16 %v2049, %v2046
      %v2242 = vpack.c.b16 %v2050, %v2047
      %v2243 = vpack.c.b16 %v2051, %v2048
      %v2244 = vpack.c.b16 %v2055, %v2052
      %v2245 = vpack.c.b16 %v2056, %v2053
      %v2246 = vpack.c.b16 %v2057, %v2054
      %v2247 = vpack.c.b16 %v2061, %v2058
      %v2248 = vpack.c.b16 %v2062, %v2059
      %v2249 = vpack.c.b16 %v2063, %v2060
      %v2250 = vpack.c.b16 %v2067, %v2064
      %v2251 = vpack.c.b16 %v2068, %v2065
      %v2252 = vpack.c.b16 %v2069, %v2066
      %v2253 = vpack.c.b16 %v2073, %v2070
      %v2254 = vpack.c.b16 %v2074, %v2071
      %v2255 = vpack.c.b16 %v2075, %v2072
      %v2256 = vpack.c.b16 %v2079, %v2076
      %v2257 = vpack.c.b16 %v2080, %v2077
      %v2258 = vpack.c.b16 %v2081, %v2078
      %v2259 = vpack.c.b16 %v2085, %v2082
      %v2260 = vpack.c.b16 %v2086, %v2083
      %v2261 = vpack.c.b16 %v2087, %v2084
      %v2262 = vpack.c.b16 %v2091, %v2088
      %v2263 = vpack.c.b16 %v2092, %v2089
      %v2264 = vpack.c.b16 %v2093, %v2090
      %v2265 = vpack.c.b16 %v2097, %v2094
      %v2266 = vpack.c.b16 %v2098, %v2095
      %v2267 = vpack.c.b16 %v2099, %v2096
      %v2268 = vpack.c.b16 %v2103, %v2100
      %v2269 = vpack.c.b16 %v2104, %v2101
      %v2270 = vpack.c.b16 %v2105, %v2102
      %v2271 = vpack.c.b16 %v2109, %v2106
      %v2272 = vpack.c.b16 %v2110, %v2107
      %v2273 = vpack.c.b16 %v2111, %v2108
      %v2274 = vpack.c.b16 %v2115, %v2112
      %v2275 = vpack.c.b16 %v2116, %v2113
      %v2276 = vpack.c.b16 %v2117, %v2114
      %v2277 = vpack.c.b16 %v2121, %v2118
      %v2278 = vpack.c.b16 %v2122, %v2119
      %v2279 = vpack.c.b16 %v2123, %v2120
      %v2280 = vpack.c.b16 %v2127, %v2124
      %v2281 = vpack.c.b16 %v2128, %v2125
      %v2282 = vpack.c.b16 %v2129, %v2126
      %v2283 = vpack.c.b16 %v2133, %v2130
      %v2284 = vpack.c.b16 %v2134, %v2131
      %v2285 = vpack.c.b16 %v2135, %v2132
      %v2286 = vpack.c.b16 %v2139, %v2136
      %v2287 = vpack.c.b16 %v2140, %v2137
      %v2288 = vpack.c.b16 %v2141, %v2138
      %v2289 = vpack.c.b16 %v2145, %v2142
      %v2290 = vpack.c.b16 %v2146, %v2143
      %v2291 = vpack.c.b16 %v2147, %v2144
      %v2292 = vpack.c.b16 %v2151, %v2148
      %v2293 = vpack.c.b16 %v2152, %v2149
      %v2294 = vpack.c.b16 %v2153, %v2150
      %v2295 = vpack.c.b16 %v2157, %v2154
      %v2296 = vpack.c.b16 %v2158, %v2155
      %v2297 = vpack.c.b16 %v2159, %v2156
      %v2298 = vpack.c.b16 %v2163, %v2160
      %v2299 = vpack.c.b16 %v2164, %v2161
      %v2300 = vpack.c.b16 %v2165, %v2162
      %v2301 = vpack.c.b16 %v2169, %v2166
      %v2302 = vpack.c.b16 %v2170, %v2167
      %v2303 = vpack.c.b16 %v2171, %v2168
      %v2304 = vpack.c.b16 %v2175, %v2172
      %v2305 = vpack.c.b16 %v2176, %v2173
      %v2306 = vpack.c.b16 %v2177, %v2174
      %v2307 = vpack.c.b16 %v2181, %v2178
      %v2308 = vpack.c.b16 %v2182, %v2179
      %v2309 = vpack.c.b16 %v2183, %v2180
      %v2310 = vpack.c.b16 %v2187, %v2184
      %v2311 = vpack.c.b16 %v2188, %v2185
      %v2312 = vpack.c.b16 %v2189, %v2186
      %v2313 = vpack.c.b16 %v2193, %v2190
      %v2314 = vpack.c.b16 %v2194, %v2191
      %v2315 = vpack.c.b16 %v2195, %v2192
      %v2316 = vpack.c.b16 %v2199, %v2196
      %v2317 = vpack.c.b16 %v2200, %v2197
      %v2318 = vpack.c.b16 %v2201, %v2198
      %v2319 = vpack.c.b16 %v2205, %v2202
      %v2320 = vpack.c.b16 %v2206, %v2203
      %v2321 = vpack.c.b16 %v2207, %v2204
      %v2322 = vpack.c.b16 %v2211, %v2208
      %v2323 = vpack.c.b16 %v2212, %v2209
      %v2324 = vpack.c.b16 %v2213, %v2210
      %v2325 = vpack.c.b16 %v2217, %v2214
      %v2326 = vpack.c.b16 %v2218, %v2215
      %v2327 = vpack.c.b16 %v2219, %v2216
      %vm2436 = vcmask 523264
      %v2437 = vsel %vm2436, %v1855, 0
      %2439 = vmatpush.bf16.msra.mxu0 %v2241
      %2440 = vmatpush.bf16.msra.mxu0 %v2238
      %2441 = vmatpush.bf16.msra.mxu0 %v2235
      %2442 = vmatpush.bf16.msra.mxu0 %v2232
      %2443 = vmatpush.bf16.msra.mxu0 %v2229
      %2444 = vmatpush.bf16.msra.mxu0 %v2226
      %2445 = vmatpush.bf16.msra.mxu0 %v2223
      %2446 = vmatpush.bf16.msra.mxu0 %v2220
      %2447 = vmatmul.bf16.gmra.mxu0 %v1851
      %v2448 = vpop.f32.mrf.mxu0
      %v2449 = vadd.f32 %v1844, %v2448
      %v2450 = vpop.f32.mrf.mxu0
      %2451 = vdwg.mxu0
      %2452 = vmatpush.bf16.msra.mxu0 %v2265
      %2453 = vmatpush.bf16.msra.mxu0 %v2262
      %2454 = vmatpush.bf16.msra.mxu0 %v2259
      %2455 = vmatpush.bf16.msra.mxu0 %v2256
      %2456 = vmatpush.bf16.msra.mxu0 %v2253
      %2457 = vmatpush.bf16.msra.mxu0 %v2250
      %2458 = vmatpush.bf16.msra.mxu0 %v2247
      %2459 = vmatpush.bf16.msra.mxu0 %v2244
      %2460 = vmatmul.bf16.gmra.mxu0 %v1852
      %v2461 = vpop.f32.mrf.mxu0
      %v2462 = vadd.f32 %v2449, %v2461
      %v2463 = vpop.f32.mrf.mxu0
      %2464 = vdwg.mxu0
      %2465 = vmatpush.bf16.msra.mxu0 %v2289
      %2466 = vmatpush.bf16.msra.mxu0 %v2286
      %2467 = vmatpush.bf16.msra.mxu0 %v2283
      %2468 = vmatpush.bf16.msra.mxu0 %v2280
      %2469 = vmatpush.bf16.msra.mxu0 %v2277
      %2470 = vmatpush.bf16.msra.mxu0 %v2274
      %2471 = vmatpush.bf16.msra.mxu0 %v2271
      %2472 = vmatpush.bf16.msra.mxu0 %v2268
      %2473 = vmatmul.bf16.gmra.mxu0 %v1853
      %v2474 = vpop.f32.mrf.mxu0
      %v2475 = vadd.f32 %v2462, %v2474
      %v2476 = vpop.f32.mrf.mxu0
      %2477 = vdwg.mxu0
      %2478 = vmatpush.bf16.msra.mxu0 %v2313
      %2479 = vmatpush.bf16.msra.mxu0 %v2310
      %2480 = vmatpush.bf16.msra.mxu0 %v2307
      %2481 = vmatpush.bf16.msra.mxu0 %v2304
      %2482 = vmatpush.bf16.msra.mxu0 %v2301
      %2483 = vmatpush.bf16.msra.mxu0 %v2298
      %2484 = vmatpush.bf16.msra.mxu0 %v2295
      %2485 = vmatpush.bf16.msra.mxu0 %v2292
      %2486 = vmatmul.bf16.gmra.mxu0 %v1854
      %v2487 = vpop.f32.mrf.mxu0
      %v2488 = vadd.f32 %v2475, %v2487
      %v2489 = vpop.f32.mrf.mxu0
      %2490 = vdwg.mxu0
      %2491 = vmatpush.bf16.msra.mxu0 0
      %2492 = vmatpush.bf16.msra.mxu0 0
      %2493 = vmatpush.bf16.msra.mxu0 0
      %2494 = vmatpush.bf16.msra.mxu0 0
      %2495 = vmatpush.bf16.msra.mxu0 %v2325
      %2496 = vmatpush.bf16.msra.mxu0 %v2322
      %2497 = vmatpush.bf16.msra.mxu0 %v2319
      %2498 = vmatpush.bf16.msra.mxu0 %v2316
      %2499 = vmatmul.bf16.gmra.mxu0 %v2437
      %v2500 = vpop.f32.mrf.mxu0
      %v2501 = vadd.f32 %v2488, %v2500
      %v2502 = vpop.f32.mrf.mxu0
      %2503 = vdwg.mxu0
      %2504 = vmatpush.bf16.msra.mxu0 %v2242
      %2505 = vmatpush.bf16.msra.mxu0 %v2239
      %2506 = vmatpush.bf16.msra.mxu0 %v2236
      %2507 = vmatpush.bf16.msra.mxu0 %v2233
      %2508 = vmatpush.bf16.msra.mxu0 %v2230
      %2509 = vmatpush.bf16.msra.mxu0 %v2227
      %2510 = vmatpush.bf16.msra.mxu0 %v2224
      %2511 = vmatpush.bf16.msra.mxu0 %v2221
      %2512 = vmatmul.bf16.gmra.mxu0 %v1851
      %v2513 = vpop.f32.mrf.mxu0
      %v2514 = vadd.f32 %v1844, %v2513
      %v2515 = vpop.f32.mrf.mxu0
      %2516 = vdwg.mxu0
      %2517 = vmatpush.bf16.msra.mxu0 %v2266
      %2518 = vmatpush.bf16.msra.mxu0 %v2263
      %2519 = vmatpush.bf16.msra.mxu0 %v2260
      %2520 = vmatpush.bf16.msra.mxu0 %v2257
      %2521 = vmatpush.bf16.msra.mxu0 %v2254
      %2522 = vmatpush.bf16.msra.mxu0 %v2251
      %2523 = vmatpush.bf16.msra.mxu0 %v2248
      %2524 = vmatpush.bf16.msra.mxu0 %v2245
      %2525 = vmatmul.bf16.gmra.mxu0 %v1852
      %v2526 = vpop.f32.mrf.mxu0
      %v2527 = vadd.f32 %v2514, %v2526
      %v2528 = vpop.f32.mrf.mxu0
      %2529 = vdwg.mxu0
      %2530 = vmatpush.bf16.msra.mxu0 %v2290
      %2531 = vmatpush.bf16.msra.mxu0 %v2287
      %2532 = vmatpush.bf16.msra.mxu0 %v2284
      %2533 = vmatpush.bf16.msra.mxu0 %v2281
      %2534 = vmatpush.bf16.msra.mxu0 %v2278
      %2535 = vmatpush.bf16.msra.mxu0 %v2275
      %2536 = vmatpush.bf16.msra.mxu0 %v2272
      %2537 = vmatpush.bf16.msra.mxu0 %v2269
      %2538 = vmatmul.bf16.gmra.mxu0 %v1853
      %v2539 = vpop.f32.mrf.mxu0
      %v2540 = vadd.f32 %v2527, %v2539
      %v2541 = vpop.f32.mrf.mxu0
      %2542 = vdwg.mxu0
      %2543 = vmatpush.bf16.msra.mxu0 %v2314
      %2544 = vmatpush.bf16.msra.mxu0 %v2311
      %2545 = vmatpush.bf16.msra.mxu0 %v2308
      %2546 = vmatpush.bf16.msra.mxu0 %v2305
      %2547 = vmatpush.bf16.msra.mxu0 %v2302
      %2548 = vmatpush.bf16.msra.mxu0 %v2299
      %2549 = vmatpush.bf16.msra.mxu0 %v2296
      %2550 = vmatpush.bf16.msra.mxu0 %v2293
      %2551 = vmatmul.bf16.gmra.mxu0 %v1854
      %v2552 = vpop.f32.mrf.mxu0
      %v2553 = vadd.f32 %v2540, %v2552
      %v2554 = vpop.f32.mrf.mxu0
      %2555 = vdwg.mxu0
      %2556 = vmatpush.bf16.msra.mxu0 0
      %2557 = vmatpush.bf16.msra.mxu0 0
      %2558 = vmatpush.bf16.msra.mxu0 0
      %2559 = vmatpush.bf16.msra.mxu0 0
      %2560 = vmatpush.bf16.msra.mxu0 %v2326
      %2561 = vmatpush.bf16.msra.mxu0 %v2323
      %2562 = vmatpush.bf16.msra.mxu0 %v2320
      %2563 = vmatpush.bf16.msra.mxu0 %v2317
      %2564 = vmatmul.bf16.gmra.mxu0 %v2437
      %v2565 = vpop.f32.mrf.mxu0
      %v2566 = vadd.f32 %v2553, %v2565
      %v2567 = vpop.f32.mrf.mxu0
      %2568 = vdwg.mxu0
      %2569 = vmatpush.bf16.msra.mxu0 %v2243
      %2570 = vmatpush.bf16.msra.mxu0 %v2240
      %2571 = vmatpush.bf16.msra.mxu0 %v2237
      %2572 = vmatpush.bf16.msra.mxu0 %v2234
      %2573 = vmatpush.bf16.msra.mxu0 %v2231
      %2574 = vmatpush.bf16.msra.mxu0 %v2228
      %2575 = vmatpush.bf16.msra.mxu0 %v2225
      %2576 = vmatpush.bf16.msra.mxu0 %v2222
      %2577 = vmatmul.bf16.gmra.mxu0 %v1851
      %v2578 = vpop.f32.mrf.mxu0
      %v2579 = vadd.f32 %v1844, %v2578
      %v2580 = vpop.f32.mrf.mxu0
      %2581 = vdwg.mxu0
      %2582 = vmatpush.bf16.msra.mxu0 %v2267
      %2583 = vmatpush.bf16.msra.mxu0 %v2264
      %2584 = vmatpush.bf16.msra.mxu0 %v2261
      %2585 = vmatpush.bf16.msra.mxu0 %v2258
      %2586 = vmatpush.bf16.msra.mxu0 %v2255
      %2587 = vmatpush.bf16.msra.mxu0 %v2252
      %2588 = vmatpush.bf16.msra.mxu0 %v2249
      %2589 = vmatpush.bf16.msra.mxu0 %v2246
      %2590 = vmatmul.bf16.gmra.mxu0 %v1852
      %v2591 = vpop.f32.mrf.mxu0
      %v2592 = vadd.f32 %v2579, %v2591
      %v2593 = vpop.f32.mrf.mxu0
      %2594 = vdwg.mxu0
      %2595 = vmatpush.bf16.msra.mxu0 %v2291
      %2596 = vmatpush.bf16.msra.mxu0 %v2288
      %2597 = vmatpush.bf16.msra.mxu0 %v2285
      %2598 = vmatpush.bf16.msra.mxu0 %v2282
      %2599 = vmatpush.bf16.msra.mxu0 %v2279
      %2600 = vmatpush.bf16.msra.mxu0 %v2276
      %2601 = vmatpush.bf16.msra.mxu0 %v2273
      %2602 = vmatpush.bf16.msra.mxu0 %v2270
      %2603 = vmatmul.bf16.gmra.mxu0 %v1853
      %v2604 = vpop.f32.mrf.mxu0
      %v2605 = vadd.f32 %v2592, %v2604
      %v2606 = vpop.f32.mrf.mxu0
      %2607 = vdwg.mxu0
      %2608 = vmatpush.bf16.msra.mxu0 %v2315
      %2609 = vmatpush.bf16.msra.mxu0 %v2312
      %2610 = vmatpush.bf16.msra.mxu0 %v2309
      %2611 = vmatpush.bf16.msra.mxu0 %v2306
      %2612 = vmatpush.bf16.msra.mxu0 %v2303
      %2613 = vmatpush.bf16.msra.mxu0 %v2300
      %2614 = vmatpush.bf16.msra.mxu0 %v2297
      %2615 = vmatpush.bf16.msra.mxu0 %v2294
      %2616 = vmatmul.bf16.gmra.mxu0 %v1854
      %v2617 = vpop.f32.mrf.mxu0
      %v2618 = vadd.f32 %v2605, %v2617
      %v2619 = vpop.f32.mrf.mxu0
      %2620 = vdwg.mxu0
      %2621 = vmatpush.bf16.msra.mxu0 0
      %2622 = vmatpush.bf16.msra.mxu0 0
      %2623 = vmatpush.bf16.msra.mxu0 0
      %2624 = vmatpush.bf16.msra.mxu0 0
      %2625 = vmatpush.bf16.msra.mxu0 %v2327
      %2626 = vmatpush.bf16.msra.mxu0 %v2324
      %2627 = vmatpush.bf16.msra.mxu0 %v2321
      %2628 = vmatpush.bf16.msra.mxu0 %v2318
      %2629 = vmatmul.bf16.gmra.mxu0 %v2437
      %v2630 = vpop.f32.mrf.mxu0
      %v2631 = vadd.f32 %v2618, %v2630
      %v2632 = vpop.f32.mrf.mxu0
      %2633 = vdwg.mxu0
      %v2636 = vrot.slane %v2566, 4
      %vm2637 = vcmask 1043456
      %v2638 = vsel %vm2637, %v2501, %v2636
      %2640 = vst [vmem:[%s251] sm:$0x77] %v2638
      %vm2641 = vcmask 256000
      %2642 = vst.msk [vmem:[%s251 + $0x8] sm:$0x7] %vm2641, %v2631
      %p2643 = scmp.lt.s32.totalorder %s17, 1
      %s2644 = scalar_select %p2643, %s17, 1
      %s2645 = smul.addr %s2644, 3
      %s2646 = smul.addr %s2645, 4
      %s2647 = scalar_lea.vmem %s6, %s2646
      // Predicated region
      $region45: #{fused_conv_relu_conv.1} parent=43 // pred_check
        %p2648 = pneg %p166
      $region46: #{fused_conv_relu_conv.1} parent=43 // pred_check_branch
        %2650 = sbr.rel (%p2648) target = $region48
      $region47: #{fused_conv_relu_conv.1} parent=43 // pred_region
        _
      $region48: #{fused_conv_relu_conv.1} parent=43 // pred_fallthru
        _
    $region44: #{fused_conv_relu_conv.1} parent=5 // pred_fallthru
      _
    %p2651 = scmp.le.s32.totalorder 2, %s12
    // Predicated region
    $region49: #{fused_conv_relu_conv.1} parent=5 // pred_check
      %p2652 = pneg %p2651
    $region50: #{fused_conv_relu_conv.1} parent=5 // pred_check_branch
      %2654 = sbr.rel (%p2652) target = $region52
    $region51: #{fused_conv_relu_conv.1} parent=5 // pred_region
      %s2655 = ssub.s32 %s12, 2
      // Predicated region
      $region53: #{fused_conv_relu_conv.1} parent=51 // pred_check
        %p2656 = pneg %p172
      $region54: #{fused_conv_relu_conv.1} parent=51 // pred_check_branch
        %2658 = sbr.rel (%p2656) target = $region56
      $region55: #{fused_conv_relu_conv.1} parent=51 // pred_region
        %p2659 = scmp.lt.s32.totalorder %s18, 1
        %s2660 = scalar_select %p2659, %s18, 1
        %s2661 = smul.addr %s2660, 3
        %s2662 = smul.addr %s2661, 4
        %s2663 = scalar_lea.vmem %s6, %s2662
      $region56: #{fused_conv_relu_conv.1} parent=51 // pred_fallthru
        _
    $region52: #{fused_conv_relu_conv.1} parent=5 // pred_fallthru
      _
  $region6: #{fused_conv_relu_conv.1} parent=0 // loop_footer
    %s16 = sadd.s32 1, %s12
  $region7: #{fused_conv_relu_conv.1} parent=0 // loop_footer_branch
    %11 = sbr.rel target = $region3
  $region8: #{fused_conv_relu_conv.1} parent=0 // loop_exit
    _

</llo_original>
